<compile_context>
chip_gen: v5e
topology: v5e:2x2
jax: 0.10.0
libtpu: 0.0.40
codegen_flags: <defaults>
</compile_context>

<pallas_src>
from functools import partial

import jax
import jax.numpy as jnp
from jax.experimental import pallas as pl
from jax.experimental.pallas import tpu as pltpu


def _conv_block_kernel(*refs, W, N_valid, eps, has_film, compute_dtype, mxu_bf16):
    """One (batch, channel-tile) program.

    refs (in order):
      x_ref     : (1, C_in_p, Np)      input, C_in padded to mult of 8, Np = H*W
                                       padded to mult of 128 (zero lanes)
      w_ref     : (9, Ct, C_in_p)      per-tap conv weights
      b_ref     : (Ct, 1)              conv bias (folded into the GN affine)
      gamma_ref : (Ct, 1)              GroupNorm weight
      beta_ref  : (Ct, 1)              GroupNorm bias
      mask_ref  : (9, Np)              f32 0/1 boundary masks (channel-invariant)
      pool_ref  : (Ct, Ct)             group pooling matrix, 1/(cpg*N) in-group
      [scale_ref, shift_ref : (1, Ct, 1)]   only when has_film
      o_ref     : (1, Ct, Np)          output tile (lane-dense, unmasked stores)
    """
    if has_film:
        (x_ref, w_ref, b_ref, gamma_ref, beta_ref, mask_ref, pool_ref,
         scale_ref, shift_ref, o_ref) = refs
    else:
        (x_ref, w_ref, b_ref, gamma_ref, beta_ref, mask_ref, pool_ref,
         o_ref) = refs
        scale_ref = shift_ref = None

    x = x_ref[0].astype(jnp.float32)           # (C_in_p, Np), f32 tap construction
    n_lanes = x.shape[-1]
    masks = mask_ref[...]                      # (9, Np) f32, loaded once
    prec = jax.lax.Precision.DEFAULT if mxu_bf16 else jax.lax.Precision.HIGHEST

    # 3x3 conv as 9 accumulated matmuls; only one tap is alive at a time.
    acc = None
    for ky in range(3):
        for kx in range(3):
            k = ky * 3 + kx
            off = (ky - 1) * W + (kx - 1)
            shifted = x if off == 0 else pltpu.roll(x, (-off) % n_lanes, axis=1)
            if off == 0 and n_lanes == N_valid:
                tap = shifted                              # center tap, no padding
            else:
                tap = shifted * masks[k:k + 1, :]          # (C_in_p, Np)
            contrib = jnp.dot(w_ref[k], tap.astype(compute_dtype),
                              precision=prec,
                              preferred_element_type=jnp.float32)  # (Ct, Np)
            acc = contrib if acc is None else acc + contrib

    # GroupNorm statistics of (conv + bias):
    # lane reductions (XLU) then a tiny group-pooling matmul on (Ct,1) vectors.
    # Padded lanes contribute exactly 0 to acc (all taps masked there), and the
    # bias terms are added analytically with the true element count N_valid.
    s1 = jnp.sum(acc, axis=-1, keepdims=True)              # (Ct, 1)  sum(y)
    s2 = jnp.sum(acc * acc, axis=-1, keepdims=True)        # (Ct, 1)  sum(y^2)
    bias = b_ref[...]                                       # (Ct, 1)
    nf = float(N_valid)
    t1 = s1 + nf * bias                                     # sum(y + b)
    t2 = s2 + 2.0 * bias * s1 + nf * bias * bias            # sum((y + b)^2)
    pool = pool_ref[...]                                    # (Ct, Ct), 1/(cpg*N)
    mean = jnp.dot(pool, t1, precision=jax.lax.Precision.HIGHEST,
                   preferred_element_type=jnp.float32)      # (Ct, 1), per-group
    ex2 = jnp.dot(pool, t2, precision=jax.lax.Precision.HIGHEST,
                  preferred_element_type=jnp.float32)       # (Ct, 1)
    var = ex2 - mean * mean
    # TODO(synk): use a centered/Welford second pass at very large H*W to avoid
    # E[x^2]-E[x]^2 cancellation.
    inv = jax.lax.rsqrt(var + eps)                          # EUP rsqrt

    # Fold conv bias + GroupNorm affine (+ optional FiLM) into one per-channel
    # affine:  out = acc * a_c + b_c.
    a_c = inv * gamma_ref[...]                              # (Ct, 1)
    b_c = (bias - mean) * a_c + beta_ref[...]               # (Ct, 1)
    if has_film:
        film_scale = scale_ref[0] + 1.0                     # (Ct, 1)
        a_c = a_c * film_scale
        b_c = b_c * film_scale + shift_ref[0]

    y = acc * a_c + b_c                                     # single (Ct, Np) FMA

    # SiLU: exp on EUP, reciprocal on EUP (approx on the bf16 path).
    y = y * pl.reciprocal(1.0 + jnp.exp(-y), approx=mxu_bf16)

    o_ref[0] = y.astype(o_ref.dtype)


def conv2d_block_unet_diff(x, w_conv, b_conv, gamma, beta, scale_shift=None,
                           *, groups=8, eps=1e-5, c_tile=None, mxu_bf16=True):
    """Forward pass of Conv2dBlockUnetDiff. x: (B, C_in, H, W) NCHW."""
    B, C_in, H, W = x.shape
    C_out = w_conv.shape[0]
    assert w_conv.shape == (C_out, C_in, 3, 3)
    assert C_out % groups == 0, "GroupNorm requires C_out % groups == 0"
    cpg = C_out // groups
    N = H * W
    Np = ((N + 127) // 128) * 128          # lane-dense: multiple of 128

    if c_tile is None:
        c_tile = C_out                      # full MXU M dimension by default
    assert C_out % c_tile == 0 and c_tile % cpg == 0
    assert c_tile == C_out or c_tile % 8 == 0
    n_ctiles = C_out // c_tile

    compute_dtype = jnp.bfloat16 if mxu_bf16 else jnp.float32

    # Pad C_in up to a multiple of 8 (sublane alignment).
    C_in_p = ((C_in + 7) // 8) * 8
    pad_c = C_in_p - C_in
    pad_n = Np - N

    # (B, C, H, W) -> (B, C, Np): free view + zero padding of extra lanes.
    x2 = x.reshape(B, C_in, N)
    if pad_c or pad_n:
        x2 = jnp.pad(x2, ((0, 0), (0, pad_c), (0, pad_n)))

    # Conv weight -> per-tap layout (9, C_out, C_in_p).
    w_p = w_conv if pad_c == 0 else jnp.pad(w_conv,
                                            ((0, 0), (0, pad_c), (0, 0), (0, 0)))
    w_taps = w_p.transpose(2, 3, 0, 1).reshape(9, C_out, C_in_p)
    w_taps = w_taps.astype(compute_dtype)

    b2 = b_conv.reshape(C_out, 1).astype(jnp.float32)
    gamma2 = gamma.reshape(C_out, 1).astype(jnp.float32)
    beta2 = beta.reshape(C_out, 1).astype(jnp.float32)

    # Channel-invariant 0/1 boundary masks, one row per 3x3 tap, shape (9, Np).
    # Rows cover: zero padding of the conv AND the padded lanes (pos >= N).
    pos = jnp.arange(Np, dtype=jnp.int32)
    hh = pos // W
    ww = pos - hh * W
    in_img = pos < N
    mask_rows = []
    for ky in range(3):
        for kx in range(3):
            dy, dx = ky - 1, kx - 1
            m = (in_img & (hh + dy >= 0) & (hh + dy < H)
                 & (ww + dx >= 0) & (ww + dx < W))
            mask_rows.append(m)
    masks = jnp.stack(mask_rows, axis=0).astype(jnp.float32)      # (9, Np)

    # Group pooling matrix (tiles are group-aligned so it is tile-invariant):
    # pool[i, j] = 1/(cpg*N) if channels i, j share a group else 0.
    ch = jnp.arange(c_tile)
    pool = ((ch[:, None] // cpg) == (ch[None, :] // cpg)).astype(jnp.float32)
    pool = pool / (cpg * N)

    has_film = scale_shift is not None
    inputs = [x2, w_taps, b2, gamma2, beta2, masks, pool]
    in_specs = [
        pl.BlockSpec((1, C_in_p, Np), lambda b, c: (b, 0, 0)),        # x
        pl.BlockSpec((9, c_tile, C_in_p), lambda b, c: (0, c, 0)),    # conv weights
        pl.BlockSpec((c_tile, 1), lambda b, c: (c, 0)),               # conv bias
        pl.BlockSpec((c_tile, 1), lambda b, c: (c, 0)),               # GN gamma
        pl.BlockSpec((c_tile, 1), lambda b, c: (c, 0)),               # GN beta
        pl.BlockSpec((9, Np), lambda b, c: (0, 0)),                   # masks
        pl.BlockSpec((c_tile, c_tile), lambda b, c: (0, 0)),          # group pooling
    ]
    if has_film:
        s, sh = scale_shift
        scale = s.reshape(B, C_out, 1).astype(jnp.float32)
        shift = sh.reshape(B, C_out, 1).astype(jnp.float32)
        inputs += [scale, shift]
        in_specs += [pl.BlockSpec((1, c_tile, 1), lambda b, c: (b, c, 0)),
                     pl.BlockSpec((1, c_tile, 1), lambda b, c: (b, c, 0))]

    # VMEM budget: double-buffered blocks + in-kernel f32 temporaries, with
    # headroom; clamped to [32 MiB, 64 MiB] so it is safe on every TPU gen
    # (raise toward 128 MiB on v5e/v6e for very large tiles).
    itm = jnp.dtype(x.dtype).itemsize
    cd = 2 if mxu_bf16 else 4
    per_lane_bytes = (
        2 * C_in_p * itm            # x input block (double buffered)
        + 2 * 9 * 4                 # masks (double buffered)
        + 2 * c_tile * itm          # output block (double buffered)
        + C_in_p * (4 + 4 + cd)     # x f32 + one live tap + its MXU-dtype cast
        + 4 * c_tile * 4            # acc / normalized y / SiLU temporaries
    )
    vmem_est = per_lane_bytes * Np + 4 * 9 * C_out * C_in_p * cd + (2 << 20)
    vmem_limit = int(min(64 * 2**20, max(32 * 2**20, round(vmem_est * 1.3))))

    kernel = partial(_conv_block_kernel, W=W, N_valid=N, eps=eps,
                     has_film=has_film, compute_dtype=compute_dtype,
                     mxu_bf16=mxu_bf16)

    y = pl.pallas_call(
        kernel,
        out_shape=jax.ShapeDtypeStruct((B, C_out, Np), x.dtype),
        grid=(B, n_ctiles),
        in_specs=in_specs,
        out_specs=pl.BlockSpec((1, c_tile, Np), lambda b, c: (b, c, 0)),
        compiler_params=pltpu.CompilerParams(
            dimension_semantics=("parallel", "parallel"),
            vmem_limit_bytes=vmem_limit),
    )(*inputs)

    # (B, C_out, Np) -> (B, C_out, H, W): drop padded lanes, free view reshape.
    return y[:, :, :N].reshape(B, C_out, H, W)


def conv2d_block_reference(x, w_conv, b_conv, gamma, beta, scale_shift=None,
                           *, groups=8, eps=1e-5):
    """Pure-JAX reproduction of the PyTorch forward, for verification."""
    y = jax.lax.conv_general_dilated(
        x, w_conv, window_strides=(1, 1), padding=((1, 1), (1, 1)),
        dimension_numbers=("NCHW", "OIHW", "NCHW"),
        precision=jax.lax.Precision.HIGHEST)
    y = y + b_conv.reshape(1, -1, 1, 1)
    B, C, H, W = y.shape
    cpg = C // groups
    yg = y.reshape(B, groups, cpg, H, W)
    mean = jnp.mean(yg, axis=(2, 3, 4), keepdims=True)
    var = jnp.mean((yg - mean) ** 2, axis=(2, 3, 4), keepdims=True)
    yg = (yg - mean) * jax.lax.rsqrt(var + eps)
    y = yg.reshape(B, C, H, W) * gamma.reshape(1, C, 1, 1) + beta.reshape(1, C, 1, 1)
    if scale_shift is not None:
        s, sh = scale_shift
        y = y * (s.reshape(B, C, 1, 1) + 1.0) + sh.reshape(B, C, 1, 1)
    return y * jax.nn.sigmoid(y)


if __name__ == "__main__":
    B, C_in, H, W = 2, 4, 16, 16
    C_out, groups = 32, 8

    key = jax.random.PRNGKey(0)
    kx, kw, kb, kg, kbe, ks, ksh = jax.random.split(key, 7)
    x = jax.random.normal(kx, (B, C_in, H, W), jnp.float32)
    w_conv = jax.random.normal(kw, (C_out, C_in, 3, 3), jnp.float32) * 0.1
    b_conv = jax.random.normal(kb, (C_out,), jnp.float32) * 0.1
    gamma = 1.0 + 0.1 * jax.random.normal(kg, (C_out,), jnp.float32)
    beta = 0.1 * jax.random.normal(kbe, (C_out,), jnp.float32)
    scale = 0.1 * jax.random.normal(ks, (B, C_out), jnp.float32)
    shift = 0.1 * jax.random.normal(ksh, (B, C_out), jnp.float32)

    y_ref = conv2d_block_reference(x, w_conv, b_conv, gamma, beta,
                                   (scale, shift), groups=groups)

    # Perf-default path: bf16 MXU operands, full-channel tile, (B, 1) grid.
    y = conv2d_block_unet_diff(x, w_conv, b_conv, gamma, beta, (scale, shift),
                               groups=groups, mxu_bf16=True)
    jax.block_until_ready(y)
    assert y.shape == (B, C_out, H, W)
    assert jnp.allclose(y, y_ref, atol=3e-2, rtol=3e-2), "bf16-MXU path mismatch"

    # f32-MXU path (tight check).
    y32 = conv2d_block_unet_diff(x, w_conv, b_conv, gamma, beta, (scale, shift),
                                 groups=groups, mxu_bf16=False)
    jax.block_until_ready(y32)
    assert jnp.allclose(y32, y_ref, atol=1e-3, rtol=1e-3), "f32-MXU path mismatch"

    # scale_shift=None path: FiLM inputs and FMA are statically skipped.
    y_none = conv2d_block_unet_diff(x, w_conv, b_conv, gamma, beta, None,
                                    groups=groups, mxu_bf16=False)
    y_none_ref = conv2d_block_reference(x, w_conv, b_conv, gamma, beta, None,
                                        groups=groups)
    jax.block_until_ready(y_none)
    assert jnp.allclose(y_none, y_none_ref, atol=1e-3, rtol=1e-3), \
        "scale_shift=None path mismatch"

    # Non-multiple-of-128 spatial size: N = 12*12 = 144 -> padded to 256 lanes.
    Hs = Ws = 12
    xs = jax.random.normal(kx, (B, C_in, Hs, Ws), jnp.float32)
    ys_ref = conv2d_block_reference(xs, w_conv, b_conv, gamma, beta,
                                    (scale, shift), groups=groups)
    ys = conv2d_block_unet_diff(xs, w_conv, b_conv, gamma, beta, (scale, shift),
                                groups=groups, mxu_bf16=False)
    jax.block_until_ready(ys)
    assert ys.shape == (B, C_out, Hs, Ws)
    assert jnp.allclose(ys, ys_ref, atol=1e-3, rtol=1e-3), "padded-N path mismatch"

    print("KERNEL_OK")
</pallas_src>

<mosaic_0001>
module attributes {stable_mosaic.version = 11 : i64} {
  func.func @_conv_block_kernel(%arg0: i32, %arg1: i32, %arg2: memref<1x8x256xf32, #tpu.memory_space<vmem>>, %arg3: memref<9x32x8xbf16, #tpu.memory_space<vmem>>, %arg4: memref<32x1xf32, #tpu.memory_space<vmem>>, %arg5: memref<32x1xf32, #tpu.memory_space<vmem>>, %arg6: memref<32x1xf32, #tpu.memory_space<vmem>>, %arg7: memref<9x256xf32, #tpu.memory_space<vmem>>, %arg8: memref<32x32xf32, #tpu.memory_space<vmem>>, %arg9: memref<1x32x1xf32, #tpu.memory_space<vmem>>, %arg10: memref<1x32x1xf32, #tpu.memory_space<vmem>>, %arg11: memref<1x32x256xf32, #tpu.memory_space<vmem>>) attributes {dimension_semantics = [#tpu.dimension_semantics<parallel>, #tpu.dimension_semantics<parallel>], iteration_bounds = array<i64: 2, 1>, scalar_prefetch = 0 : i64, scratch_operands = 0 : i64, tpu.core_type = #tpu.core_type<tc>, window_params = [{transform_indices = @transform_0, window_bounds = array<i64: 1, 8, 256>}, {transform_indices = @transform_1, window_bounds = array<i64: 9, 32, 8>}, {transform_indices = @transform_2, window_bounds = array<i64: 32, 1>}, {transform_indices = @transform_3, window_bounds = array<i64: 32, 1>}, {transform_indices = @transform_4, window_bounds = array<i64: 32, 1>}, {pipeline_mode = #tpu.pipeline_mode<synchronous>, transform_indices = @transform_5, window_bounds = array<i64: 9, 256>}, {pipeline_mode = #tpu.pipeline_mode<synchronous>, transform_indices = @transform_6, window_bounds = array<i64: 32, 32>}, {transform_indices = @transform_7, window_bounds = array<i64: 1, 32, 1>}, {transform_indices = @transform_8, window_bounds = array<i64: 1, 32, 1>}, {transform_indices = @transform_9, window_bounds = array<i64: 1, 32, 256>}]} {
    %c0 = arith.constant 0 : index
    %c0_0 = arith.constant 0 : index
    %c0_1 = arith.constant 0 : index
    %0 = vector.load %arg2[%c0, %c0_0, %c0_1] : memref<1x8x256xf32, #tpu.memory_space<vmem>>, vector<1x8x256xf32>
    %1 = vector.shape_cast %0 : vector<1x8x256xf32> to vector<8x256xf32>
    %c0_2 = arith.constant 0 : index
    %c0_3 = arith.constant 0 : index
    %2 = vector.load %arg7[%c0_2, %c0_3] : memref<9x256xf32, #tpu.memory_space<vmem>>, vector<9x256xf32>
    %c17_i32 = arith.constant 17 : i32
    %3 = tpu.dynamic_rotate %1 by %c17_i32 dim 1 : vector<8x256xf32>, i32 -> vector<8x256xf32>
    %4 = vector.extract_strided_slice %2 {offsets = [0, 0], sizes = [1, 256], strides = [1, 1]} : vector<9x256xf32> to vector<1x256xf32>
    %5 = vector.broadcast %4 : vector<1x256xf32> to vector<8x256xf32>
    %6 = arith.mulf %3, %5 : vector<8x256xf32>
    %c0_4 = arith.constant 0 : index
    %c0_5 = arith.constant 0 : index
    %c0_6 = arith.constant 0 : index
    %7 = vector.load %arg3[%c0_4, %c0_5, %c0_6] : memref<9x32x8xbf16, #tpu.memory_space<vmem>>, vector<1x32x8xbf16>
    %8 = vector.shape_cast %7 : vector<1x32x8xbf16> to vector<32x8xbf16>
    %9 = arith.truncf %6 : vector<8x256xf32> to vector<8x256xbf16>
    %cst = arith.constant dense<0.000000e+00> : vector<32x256xf32>
    %10 = tpu.matmul %8, %9, %cst {dimension_numbers = #tpu.dot_dimension_numbers<[1], [0], [0], [1], [0, 0, 1, 1], [], []>} : vector<32x8xbf16>, vector<8x256xbf16>, vector<32x256xf32> -> vector<32x256xf32>
    %c16_i32 = arith.constant 16 : i32
    %11 = tpu.dynamic_rotate %1 by %c16_i32 dim 1 : vector<8x256xf32>, i32 -> vector<8x256xf32>
    %12 = vector.extract_strided_slice %2 {offsets = [1, 0], sizes = [1, 256], strides = [1, 1]} : vector<9x256xf32> to vector<1x256xf32>
    %13 = vector.broadcast %12 : vector<1x256xf32> to vector<8x256xf32>
    %14 = arith.mulf %11, %13 : vector<8x256xf32>
    %c1 = arith.constant 1 : index
    %c0_7 = arith.constant 0 : index
    %c0_8 = arith.constant 0 : index
    %15 = vector.load %arg3[%c1, %c0_7, %c0_8] : memref<9x32x8xbf16, #tpu.memory_space<vmem>>, vector<1x32x8xbf16>
    %16 = vector.shape_cast %15 : vector<1x32x8xbf16> to vector<32x8xbf16>
    %17 = arith.truncf %14 : vector<8x256xf32> to vector<8x256xbf16>
    %cst_9 = arith.constant dense<0.000000e+00> : vector<32x256xf32>
    %18 = tpu.matmul %16, %17, %cst_9 {dimension_numbers = #tpu.dot_dimension_numbers<[1], [0], [0], [1], [0, 0, 1, 1], [], []>} : vector<32x8xbf16>, vector<8x256xbf16>, vector<32x256xf32> -> vector<32x256xf32>
    %19 = arith.addf %10, %18 : vector<32x256xf32>
    %c15_i32 = arith.constant 15 : i32
    %20 = tpu.dynamic_rotate %1 by %c15_i32 dim 1 : vector<8x256xf32>, i32 -> vector<8x256xf32>
    %21 = vector.extract_strided_slice %2 {offsets = [2, 0], sizes = [1, 256], strides = [1, 1]} : vector<9x256xf32> to vector<1x256xf32>
    %22 = vector.broadcast %21 : vector<1x256xf32> to vector<8x256xf32>
    %23 = arith.mulf %20, %22 : vector<8x256xf32>
    %c2 = arith.constant 2 : index
    %c0_10 = arith.constant 0 : index
    %c0_11 = arith.constant 0 : index
    %24 = vector.load %arg3[%c2, %c0_10, %c0_11] : memref<9x32x8xbf16, #tpu.memory_space<vmem>>, vector<1x32x8xbf16>
    %25 = vector.shape_cast %24 : vector<1x32x8xbf16> to vector<32x8xbf16>
    %26 = arith.truncf %23 : vector<8x256xf32> to vector<8x256xbf16>
    %cst_12 = arith.constant dense<0.000000e+00> : vector<32x256xf32>
    %27 = tpu.matmul %25, %26, %cst_12 {dimension_numbers = #tpu.dot_dimension_numbers<[1], [0], [0], [1], [0, 0, 1, 1], [], []>} : vector<32x8xbf16>, vector<8x256xbf16>, vector<32x256xf32> -> vector<32x256xf32>
    %28 = arith.addf %19, %27 : vector<32x256xf32>
    %c1_i32 = arith.constant 1 : i32
    %29 = tpu.dynamic_rotate %1 by %c1_i32 dim 1 : vector<8x256xf32>, i32 -> vector<8x256xf32>
    %30 = vector.extract_strided_slice %2 {offsets = [3, 0], sizes = [1, 256], strides = [1, 1]} : vector<9x256xf32> to vector<1x256xf32>
    %31 = vector.broadcast %30 : vector<1x256xf32> to vector<8x256xf32>
    %32 = arith.mulf %29, %31 : vector<8x256xf32>
    %c3 = arith.constant 3 : index
    %c0_13 = arith.constant 0 : index
    %c0_14 = arith.constant 0 : index
    %33 = vector.load %arg3[%c3, %c0_13, %c0_14] : memref<9x32x8xbf16, #tpu.memory_space<vmem>>, vector<1x32x8xbf16>
    %34 = vector.shape_cast %33 : vector<1x32x8xbf16> to vector<32x8xbf16>
    %35 = arith.truncf %32 : vector<8x256xf32> to vector<8x256xbf16>
    %cst_15 = arith.constant dense<0.000000e+00> : vector<32x256xf32>
    %36 = tpu.matmul %34, %35, %cst_15 {dimension_numbers = #tpu.dot_dimension_numbers<[1], [0], [0], [1], [0, 0, 1, 1], [], []>} : vector<32x8xbf16>, vector<8x256xbf16>, vector<32x256xf32> -> vector<32x256xf32>
    %37 = arith.addf %28, %36 : vector<32x256xf32>
    %c4 = arith.constant 4 : index
    %c0_16 = arith.constant 0 : index
    %c0_17 = arith.constant 0 : index
    %38 = vector.load %arg3[%c4, %c0_16, %c0_17] : memref<9x32x8xbf16, #tpu.memory_space<vmem>>, vector<1x32x8xbf16>
    %39 = vector.shape_cast %38 : vector<1x32x8xbf16> to vector<32x8xbf16>
    %40 = arith.truncf %1 : vector<8x256xf32> to vector<8x256xbf16>
    %cst_18 = arith.constant dense<0.000000e+00> : vector<32x256xf32>
    %41 = tpu.matmul %39, %40, %cst_18 {dimension_numbers = #tpu.dot_dimension_numbers<[1], [0], [0], [1], [0, 0, 1, 1], [], []>} : vector<32x8xbf16>, vector<8x256xbf16>, vector<32x256xf32> -> vector<32x256xf32>
    %42 = arith.addf %37, %41 : vector<32x256xf32>
    %c255_i32 = arith.constant 255 : i32
    %43 = tpu.dynamic_rotate %1 by %c255_i32 dim 1 : vector<8x256xf32>, i32 -> vector<8x256xf32>
    %44 = vector.extract_strided_slice %2 {offsets = [5, 0], sizes = [1, 256], strides = [1, 1]} : vector<9x256xf32> to vector<1x256xf32>
    %45 = vector.broadcast %44 : vector<1x256xf32> to vector<8x256xf32>
    %46 = arith.mulf %43, %45 : vector<8x256xf32>
    %c5 = arith.constant 5 : index
    %c0_19 = arith.constant 0 : index
    %c0_20 = arith.constant 0 : index
    %47 = vector.load %arg3[%c5, %c0_19, %c0_20] : memref<9x32x8xbf16, #tpu.memory_space<vmem>>, vector<1x32x8xbf16>
    %48 = vector.shape_cast %47 : vector<1x32x8xbf16> to vector<32x8xbf16>
    %49 = arith.truncf %46 : vector<8x256xf32> to vector<8x256xbf16>
    %cst_21 = arith.constant dense<0.000000e+00> : vector<32x256xf32>
    %50 = tpu.matmul %48, %49, %cst_21 {dimension_numbers = #tpu.dot_dimension_numbers<[1], [0], [0], [1], [0, 0, 1, 1], [], []>} : vector<32x8xbf16>, vector<8x256xbf16>, vector<32x256xf32> -> vector<32x256xf32>
    %51 = arith.addf %42, %50 : vector<32x256xf32>
    %c241_i32 = arith.constant 241 : i32
    %52 = tpu.dynamic_rotate %1 by %c241_i32 dim 1 : vector<8x256xf32>, i32 -> vector<8x256xf32>
    %53 = vector.extract_strided_slice %2 {offsets = [6, 0], sizes = [1, 256], strides = [1, 1]} : vector<9x256xf32> to vector<1x256xf32>
    %54 = vector.broadcast %53 : vector<1x256xf32> to vector<8x256xf32>
    %55 = arith.mulf %52, %54 : vector<8x256xf32>
    %c6 = arith.constant 6 : index
    %c0_22 = arith.constant 0 : index
    %c0_23 = arith.constant 0 : index
    %56 = vector.load %arg3[%c6, %c0_22, %c0_23] : memref<9x32x8xbf16, #tpu.memory_space<vmem>>, vector<1x32x8xbf16>
    %57 = vector.shape_cast %56 : vector<1x32x8xbf16> to vector<32x8xbf16>
    %58 = arith.truncf %55 : vector<8x256xf32> to vector<8x256xbf16>
    %cst_24 = arith.constant dense<0.000000e+00> : vector<32x256xf32>
    %59 = tpu.matmul %57, %58, %cst_24 {dimension_numbers = #tpu.dot_dimension_numbers<[1], [0], [0], [1], [0, 0, 1, 1], [], []>} : vector<32x8xbf16>, vector<8x256xbf16>, vector<32x256xf32> -> vector<32x256xf32>
    %60 = arith.addf %51, %59 : vector<32x256xf32>
    %c240_i32 = arith.constant 240 : i32
    %61 = tpu.dynamic_rotate %1 by %c240_i32 dim 1 : vector<8x256xf32>, i32 -> vector<8x256xf32>
    %62 = vector.extract_strided_slice %2 {offsets = [7, 0], sizes = [1, 256], strides = [1, 1]} : vector<9x256xf32> to vector<1x256xf32>
    %63 = vector.broadcast %62 : vector<1x256xf32> to vector<8x256xf32>
    %64 = arith.mulf %61, %63 : vector<8x256xf32>
    %c7 = arith.constant 7 : index
    %c0_25 = arith.constant 0 : index
    %c0_26 = arith.constant 0 : index
    %65 = vector.load %arg3[%c7, %c0_25, %c0_26] : memref<9x32x8xbf16, #tpu.memory_space<vmem>>, vector<1x32x8xbf16>
    %66 = vector.shape_cast %65 : vector<1x32x8xbf16> to vector<32x8xbf16>
    %67 = arith.truncf %64 : vector<8x256xf32> to vector<8x256xbf16>
    %cst_27 = arith.constant dense<0.000000e+00> : vector<32x256xf32>
    %68 = tpu.matmul %66, %67, %cst_27 {dimension_numbers = #tpu.dot_dimension_numbers<[1], [0], [0], [1], [0, 0, 1, 1], [], []>} : vector<32x8xbf16>, vector<8x256xbf16>, vector<32x256xf32> -> vector<32x256xf32>
    %69 = arith.addf %60, %68 : vector<32x256xf32>
    %c239_i32 = arith.constant 239 : i32
    %70 = tpu.dynamic_rotate %1 by %c239_i32 dim 1 : vector<8x256xf32>, i32 -> vector<8x256xf32>
    %71 = vector.extract_strided_slice %2 {offsets = [8, 0], sizes = [1, 256], strides = [1, 1]} : vector<9x256xf32> to vector<1x256xf32>
    %72 = vector.broadcast %71 : vector<1x256xf32> to vector<8x256xf32>
    %73 = arith.mulf %70, %72 : vector<8x256xf32>
    %c8 = arith.constant 8 : index
    %c0_28 = arith.constant 0 : index
    %c0_29 = arith.constant 0 : index
    %74 = vector.load %arg3[%c8, %c0_28, %c0_29] : memref<9x32x8xbf16, #tpu.memory_space<vmem>>, vector<1x32x8xbf16>
    %75 = vector.shape_cast %74 : vector<1x32x8xbf16> to vector<32x8xbf16>
    %76 = arith.truncf %73 : vector<8x256xf32> to vector<8x256xbf16>
    %cst_30 = arith.constant dense<0.000000e+00> : vector<32x256xf32>
    %77 = tpu.matmul %75, %76, %cst_30 {dimension_numbers = #tpu.dot_dimension_numbers<[1], [0], [0], [1], [0, 0, 1, 1], [], []>} : vector<32x8xbf16>, vector<8x256xbf16>, vector<32x256xf32> -> vector<32x256xf32>
    %78 = arith.addf %69, %77 : vector<32x256xf32>
    %cst_31 = arith.constant dense<0.000000e+00> : vector<32xf32>
    %79 = vector.multi_reduction <add>, %78, %cst_31 [1] : vector<32x256xf32> to vector<32xf32>
    %80 = vector.shape_cast %79 : vector<32xf32> to vector<32x1xf32>
    %81 = arith.mulf %78, %78 : vector<32x256xf32>
    %cst_32 = arith.constant dense<0.000000e+00> : vector<32xf32>
    %82 = vector.multi_reduction <add>, %81, %cst_32 [1] : vector<32x256xf32> to vector<32xf32>
    %83 = vector.shape_cast %82 : vector<32xf32> to vector<32x1xf32>
    %c0_33 = arith.constant 0 : index
    %c0_34 = arith.constant 0 : index
    %84 = vector.load %arg4[%c0_33, %c0_34] : memref<32x1xf32, #tpu.memory_space<vmem>>, vector<32x1xf32>
    %cst_35 = arith.constant 2.560000e+02 : f32
    %85 = vector.broadcast %cst_35 : f32 to vector<32x1xf32>
    %86 = arith.mulf %85, %84 : vector<32x1xf32>
    %87 = arith.addf %80, %86 : vector<32x1xf32>
    %cst_36 = arith.constant 2.000000e+00 : f32
    %88 = vector.broadcast %cst_36 : f32 to vector<32x1xf32>
    %89 = arith.mulf %88, %84 : vector<32x1xf32>
    %90 = arith.mulf %89, %80 : vector<32x1xf32>
    %91 = arith.addf %83, %90 : vector<32x1xf32>
    %cst_37 = arith.constant 2.560000e+02 : f32
    %92 = vector.broadcast %cst_37 : f32 to vector<32x1xf32>
    %93 = arith.mulf %92, %84 : vector<32x1xf32>
    %94 = arith.mulf %93, %84 : vector<32x1xf32>
    %95 = arith.addf %91, %94 : vector<32x1xf32>
    %c0_38 = arith.constant 0 : index
    %c0_39 = arith.constant 0 : index
    %96 = vector.load %arg8[%c0_38, %c0_39] : memref<32x32xf32, #tpu.memory_space<vmem>>, vector<32x32xf32>
    %cst_40 = arith.constant dense<0.000000e+00> : vector<32x1xf32>
    %97 = tpu.matmul %96, %87, %cst_40 {dimension_numbers = #tpu.dot_dimension_numbers<[1], [0], [0], [1], [0, 0, 1, 1], [], []>, precision = #tpu.contract_precision<fp32>} : vector<32x32xf32>, vector<32x1xf32>, vector<32x1xf32> -> vector<32x1xf32>
    %cst_41 = arith.constant dense<0.000000e+00> : vector<32x1xf32>
    %98 = tpu.matmul %96, %95, %cst_41 {dimension_numbers = #tpu.dot_dimension_numbers<[1], [0], [0], [1], [0, 0, 1, 1], [], []>, precision = #tpu.contract_precision<fp32>} : vector<32x32xf32>, vector<32x1xf32>, vector<32x1xf32> -> vector<32x1xf32>
    %99 = arith.mulf %97, %97 : vector<32x1xf32>
    %100 = arith.subf %98, %99 : vector<32x1xf32>
    %cst_42 = arith.constant 9.99999974E-6 : f32
    %101 = vector.broadcast %cst_42 : f32 to vector<32x1xf32>
    %102 = arith.addf %100, %101 : vector<32x1xf32>
    %103 = math.rsqrt %102 : vector<32x1xf32>
    %c0_43 = arith.constant 0 : index
    %c0_44 = arith.constant 0 : index
    %104 = vector.load %arg5[%c0_43, %c0_44] : memref<32x1xf32, #tpu.memory_space<vmem>>, vector<32x1xf32>
    %105 = arith.mulf %103, %104 : vector<32x1xf32>
    %106 = arith.subf %84, %97 : vector<32x1xf32>
    %107 = arith.mulf %106, %105 : vector<32x1xf32>
    %c0_45 = arith.constant 0 : index
    %c0_46 = arith.constant 0 : index
    %108 = vector.load %arg6[%c0_45, %c0_46] : memref<32x1xf32, #tpu.memory_space<vmem>>, vector<32x1xf32>
    %109 = arith.addf %107, %108 : vector<32x1xf32>
    %c0_47 = arith.constant 0 : index
    %c0_48 = arith.constant 0 : index
    %c0_49 = arith.constant 0 : index
    %110 = vector.load %arg9[%c0_47, %c0_48, %c0_49] : memref<1x32x1xf32, #tpu.memory_space<vmem>>, vector<1x32x1xf32>
    %111 = vector.shape_cast %110 : vector<1x32x1xf32> to vector<32x1xf32>
    %cst_50 = arith.constant 1.000000e+00 : f32
    %112 = vector.broadcast %cst_50 : f32 to vector<32x1xf32>
    %113 = arith.addf %111, %112 : vector<32x1xf32>
    %114 = arith.mulf %105, %113 : vector<32x1xf32>
    %115 = arith.mulf %109, %113 : vector<32x1xf32>
    %c0_51 = arith.constant 0 : index
    %c0_52 = arith.constant 0 : index
    %c0_53 = arith.constant 0 : index
    %116 = vector.load %arg10[%c0_51, %c0_52, %c0_53] : memref<1x32x1xf32, #tpu.memory_space<vmem>>, vector<1x32x1xf32>
    %117 = vector.shape_cast %116 : vector<1x32x1xf32> to vector<32x1xf32>
    %118 = arith.addf %115, %117 : vector<32x1xf32>
    %119 = vector.broadcast %114 : vector<32x1xf32> to vector<32x256xf32>
    %120 = arith.mulf %78, %119 : vector<32x256xf32>
    %121 = vector.broadcast %118 : vector<32x1xf32> to vector<32x256xf32>
    %122 = arith.addf %120, %121 : vector<32x256xf32>
    %cst_54 = arith.constant 0.000000e+00 : f32
    %123 = vector.broadcast %cst_54 : f32 to vector<32x256xf32>
    %124 = arith.subf %123, %122 : vector<32x256xf32>
    %125 = math.exp %124 : vector<32x256xf32>
    %cst_55 = arith.constant 1.000000e+00 : f32
    %126 = vector.broadcast %cst_55 : f32 to vector<32x256xf32>
    %127 = arith.addf %126, %125 : vector<32x256xf32>
    %128 = tpu.reciprocal %127 {approx = true} : vector<32x256xf32> -> vector<32x256xf32>
    %129 = arith.mulf %122, %128 : vector<32x256xf32>
    %c0_56 = arith.constant 0 : index
    %c0_57 = arith.constant 0 : index
    %c0_58 = arith.constant 0 : index
    %130 = vector.load %arg11[%c0_56, %c0_57, %c0_58] : memref<1x32x256xf32, #tpu.memory_space<vmem>>, vector<1x32x256xf32>
    %131 = vector.shape_cast %130 : vector<1x32x256xf32> to vector<32x256xf32>
    %132 = vector.shape_cast %129 : vector<32x256xf32> to vector<1x32x256xf32>
    tpu.vector_store %arg11[%c0_56, %c0_57, %c0_58], %132 {strides = array<i32>} : memref<1x32x256xf32, #tpu.memory_space<vmem>>, vector<1x32x256xf32>,
    return
  }
  func.func @transform_0(%arg0: i32, %arg1: i32) -> (i32, i32, i32) {
    %c0_i32 = arith.constant 0 : i32
    %c0_i32_0 = arith.constant 0 : i32
    %c0_i32_1 = arith.constant 0 : i32
    return %arg0, %c0_i32, %c0_i32_0 : i32, i32, i32
  }
  func.func @transform_1(%arg0: i32, %arg1: i32) -> (i32, i32, i32) {
    %c0_i32 = arith.constant 0 : i32
    %c0_i32_0 = arith.constant 0 : i32
    %c0_i32_1 = arith.constant 0 : i32
    return %c0_i32, %arg1, %c0_i32_0 : i32, i32, i32
  }
  func.func @transform_2(%arg0: i32, %arg1: i32) -> (i32, i32) {
    %c0_i32 = arith.constant 0 : i32
    %c0_i32_0 = arith.constant 0 : i32
    return %arg1, %c0_i32 : i32, i32
  }
  func.func @transform_3(%arg0: i32, %arg1: i32) -> (i32, i32) {
    %c0_i32 = arith.constant 0 : i32
    %c0_i32_0 = arith.constant 0 : i32
    return %arg1, %c0_i32 : i32, i32
  }
  func.func @transform_4(%arg0: i32, %arg1: i32) -> (i32, i32) {
    %c0_i32 = arith.constant 0 : i32
    %c0_i32_0 = arith.constant 0 : i32
    return %arg1, %c0_i32 : i32, i32
  }
  func.func @transform_5(%arg0: i32, %arg1: i32) -> (i32, i32) {
    %c0_i32 = arith.constant 0 : i32
    %c0_i32_0 = arith.constant 0 : i32
    %c0_i32_1 = arith.constant 0 : i32
    return %c0_i32, %c0_i32_0 : i32, i32
  }
  func.func @transform_6(%arg0: i32, %arg1: i32) -> (i32, i32) {
    %c0_i32 = arith.constant 0 : i32
    %c0_i32_0 = arith.constant 0 : i32
    %c0_i32_1 = arith.constant 0 : i32
    return %c0_i32, %c0_i32_0 : i32, i32
  }
  func.func @transform_7(%arg0: i32, %arg1: i32) -> (i32, i32, i32) {
    %c0_i32 = arith.constant 0 : i32
    %c0_i32_0 = arith.constant 0 : i32
    return %arg0, %arg1, %c0_i32 : i32, i32, i32
  }
  func.func @transform_8(%arg0: i32, %arg1: i32) -> (i32, i32, i32) {
    %c0_i32 = arith.constant 0 : i32
    %c0_i32_0 = arith.constant 0 : i32
    return %arg0, %arg1, %c0_i32 : i32, i32, i32
  }
  func.func @transform_9(%arg0: i32, %arg1: i32) -> (i32, i32, i32) {
    %c0_i32 = arith.constant 0 : i32
    %c0_i32_0 = arith.constant 0 : i32
    return %arg0, %arg1, %c0_i32 : i32, i32, i32
  }
}

</mosaic_0001>

<llo_original>
// kernel: tpu_custom_call.1
$region0: #{tpu_custom_call.1}
  #allocation0 [shape = 'u32[]', space=smem, size = 0x4, offset = 0x4, fixed_abs, tag = 'smem constant byte address 0x4 - core index']
  #allocation1 [shape = 'u32[72,128]{1,0:T(1,128)}', space=vmem, size = 0x9000, scoped, tag = 'internal scratch']
  %s0 = inlined_call_operand.vmem [shape: f32[2,8,256], index: 0, kind: input, shape index: {}]
  %s1 = inlined_call_operand.vmem [shape: bf16[9,32,8], index: 1, kind: input, shape index: {}]
  %s2 = inlined_call_operand.vmem [shape: f32[32,1], index: 2, kind: input, shape index: {}]
  %s3 = inlined_call_operand.vmem [shape: f32[32,1], index: 3, kind: input, shape index: {}]
  %s4 = inlined_call_operand.vmem [shape: f32[32,1], index: 4, kind: input, shape index: {}]
  %s5 = inlined_call_operand.vmem [shape: f32[9,256], index: 5, kind: input, shape index: {}]
  %s6 = inlined_call_operand.vmem [shape: f32[32,32], index: 6, kind: input, shape index: {}]
  %s7 = inlined_call_operand.vmem [shape: f32[2,32,1], index: 7, kind: input, shape index: {}]
  %s8 = inlined_call_operand.vmem [shape: f32[2,32,1], index: 8, kind: input, shape index: {}]
  %s9 = inlined_call_operand.hbm [shape: f32[2,32,256], index: 9, kind: output, shape index: {}]
  %s10 = sld [smem:[#allocation0]]
  $region69: #{tpu_custom_call.1} parent=0
    _
  %s12 = ssub.s32 1, %s10
  %s13 = scalar_select 0, %s12, %s10
  $region1: #{tpu_custom_call.1} parent=0
    #allocation2 [shape = 'u8[65536]{0}', space=vmem, size = 0x10000, scoped, tag = 'output window, operand 0']
    #allocation3 [shape = 's32[2]{0}', space=sflag, size = 0x8, scoped, tag = 'scoped memory for tpu_custom_call.1']
    %14 = vsyncpa [#allocation3], 0
    %s15 = scalar_lea.sflag [#allocation3], 1
    %16 = vsyncpa %s15, 0
    loop: start=0, step=1, limit=4
    $region2: #{tpu_custom_call.1} parent=1 // loop_pre_header
      _
    $region3: #{tpu_custom_call.1} parent=1 // loop_header
      %s18 = sphi 0, %s22
      %p19 = scmp.ge.s32.totalorder %s18, 4
      %s25 = sphi 0, %s37
      %s26 = sphi 0, %s33
      %s27 = sphi 0, %s25
      %s28 = sphi 0, %s26
      %s29 = sphi 0, %s27
      %s30 = sphi 0, %s28
      %s40 = sphi 0, %s42
      %s43 = sphi 0, %s40
      %s44 = sphi 0, %s43
      %s60 = sphi 0, %s44
      %s66 = sphi 0, %s68
      %s69 = sphi 0, %s66
      %s70 = sphi 0, %s69
      %s86 = sphi 0, %s70
      %s92 = sphi 0, %s94
      %s95 = sphi 0, %s92
      %s96 = sphi 0, %s95
      %s112 = sphi 0, %s96
      %s118 = sphi 0, %s120
      %s121 = sphi 0, %s118
      %s122 = sphi 0, %s121
      %s138 = sphi 0, %s122
      %s144 = sphi 0, %s146
      %s147 = sphi 0, %s144
      %s148 = sphi 0, %s147
      %s164 = sphi 0, %s148
      %s168 = sphi 0, %s168
      %s170 = sphi 0, %s168
      %s171 = sphi 0, %s170
      %s185 = sphi 0, %s171
      %s189 = sphi 0, %s189
      %s191 = sphi 0, %s189
      %s192 = sphi 0, %s191
      %s206 = sphi 0, %s192
      %s214 = sphi 0, %s216
      %s217 = sphi 0, %s214
      %s218 = sphi 0, %s217
      %s234 = sphi 0, %s218
      %s242 = sphi 0, %s244
      %s245 = sphi 0, %s242
      %s246 = sphi 0, %s245
      %s262 = sphi 0, %s246
      %s270 = sphi 0, %s272
      %s273 = sphi 0, %s270
      %s274 = sphi 0, %s273
      %s290 = sphi 0, %s274
    $region4: #{tpu_custom_call.1} parent=1 // loop_header_branch
      %21 = sbr.rel (%p19) target = $region8
    $region5: #{tpu_custom_call.1} parent=1 // loop_body
      %s23 = ssub.s32 %s18, 1
      %s24 = ssub.s32 %s18, 2
      %s31 = sadd.s32 1, %s26
      %p32 = scmp.ge.s32.totalorder %s31, 1
      %s33 = scalar_select %p32, 0, %s31
      %s34 = sadd.s32 1, %s25
      %s35 = scalar_select %p32, %s34, %s25
      %p36 = scmp.ge.s32.totalorder %s35, 2
      %s37 = scalar_select %p36, 0, %s35
      %s38 = ssub.s32 %s25, %s37
      %p39 = scmp.eq.s32.totalorder %s38, 0
      %s41 = sadd.s32 %s40, 1
      %s42 = scalar_select %p39, %s40, %s41
      %p45 = pneg %p39
      %p46 = scmp.eq.s32.totalorder %s18, 1
      %p47 = por %p45, %p46
      %p48 = scmp.ne.s32.totalorder %s40, %s43
      %p49 = scmp.eq.s32.totalorder %s18, 0
      %p50 = por %p48, %p49
      %p51 = scmp.ne.s32.totalorder %s40, %s43
      %p52 = scmp.eq.s32.totalorder %s23, 1
      %p53 = por %p51, %p52
      %p54 = scmp.ne.s32.totalorder %s43, %s44
      %p55 = scmp.eq.s32.totalorder %s23, 0
      %p56 = por %p54, %p55
      %p57 = scmp.ne.s32.totalorder %s43, %s44
      %p58 = scmp.eq.s32.totalorder %s24, 1
      %p59 = por %p57, %p58
      %p61 = scmp.ne.s32.totalorder %s44, %s60
      %p62 = scmp.eq.s32.totalorder %s24, 0
      %p63 = por %p61, %p62
      %s64 = ssub.s32 %s26, %s33
      %p65 = scmp.eq.s32.totalorder %s64, 0
      %s67 = sadd.s32 %s66, 1
      %s68 = scalar_select %p65, %s66, %s67
      %p71 = pneg %p65
      %p72 = scmp.eq.s32.totalorder %s18, 1
      %p73 = por %p71, %p72
      %p74 = scmp.ne.s32.totalorder %s66, %s69
      %p75 = scmp.eq.s32.totalorder %s18, 0
      %p76 = por %p74, %p75
      %p77 = scmp.ne.s32.totalorder %s66, %s69
      %p78 = scmp.eq.s32.totalorder %s23, 1
      %p79 = por %p77, %p78
      %p80 = scmp.ne.s32.totalorder %s69, %s70
      %p81 = scmp.eq.s32.totalorder %s23, 0
      %p82 = por %p80, %p81
      %p83 = scmp.ne.s32.totalorder %s69, %s70
      %p84 = scmp.eq.s32.totalorder %s24, 1
      %p85 = por %p83, %p84
      %p87 = scmp.ne.s32.totalorder %s70, %s86
      %p88 = scmp.eq.s32.totalorder %s24, 0
      %p89 = por %p87, %p88
      %s90 = ssub.s32 %s26, %s33
      %p91 = scmp.eq.s32.totalorder %s90, 0
      %s93 = sadd.s32 %s92, 1
      %s94 = scalar_select %p91, %s92, %s93
      %p97 = pneg %p91
      %p98 = scmp.eq.s32.totalorder %s18, 1
      %p99 = por %p97, %p98
      %p100 = scmp.ne.s32.totalorder %s92, %s95
      %p101 = scmp.eq.s32.totalorder %s18, 0
      %p102 = por %p100, %p101
      %p103 = scmp.ne.s32.totalorder %s92, %s95
      %p104 = scmp.eq.s32.totalorder %s23, 1
      %p105 = por %p103, %p104
      %p106 = scmp.ne.s32.totalorder %s95, %s96
      %p107 = scmp.eq.s32.totalorder %s23, 0
      %p108 = por %p106, %p107
      %p109 = scmp.ne.s32.totalorder %s95, %s96
      %p110 = scmp.eq.s32.totalorder %s24, 1
      %p111 = por %p109, %p110
      %p113 = scmp.ne.s32.totalorder %s96, %s112
      %p114 = scmp.eq.s32.totalorder %s24, 0
      %p115 = por %p113, %p114
      %s116 = ssub.s32 %s26, %s33
      %p117 = scmp.eq.s32.totalorder %s116, 0
      %s119 = sadd.s32 %s118, 1
      %s120 = scalar_select %p117, %s118, %s119
      %p123 = pneg %p117
      %p124 = scmp.eq.s32.totalorder %s18, 1
      %p125 = por %p123, %p124
      %p126 = scmp.ne.s32.totalorder %s118, %s121
      %p127 = scmp.eq.s32.totalorder %s18, 0
      %p128 = por %p126, %p127
      %p129 = scmp.ne.s32.totalorder %s118, %s121
      %p130 = scmp.eq.s32.totalorder %s23, 1
      %p131 = por %p129, %p130
      %p132 = scmp.ne.s32.totalorder %s121, %s122
      %p133 = scmp.eq.s32.totalorder %s23, 0
      %p134 = por %p132, %p133
      %p135 = scmp.ne.s32.totalorder %s121, %s122
      %p136 = scmp.eq.s32.totalorder %s24, 1
      %p137 = por %p135, %p136
      %p139 = scmp.ne.s32.totalorder %s122, %s138
      %p140 = scmp.eq.s32.totalorder %s24, 0
      %p141 = por %p139, %p140
      %s142 = ssub.s32 %s26, %s33
      %p143 = scmp.eq.s32.totalorder %s142, 0
      %s145 = sadd.s32 %s144, 1
      %s146 = scalar_select %p143, %s144, %s145
      %p149 = pneg %p143
      %p150 = scmp.eq.s32.totalorder %s18, 1
      %p151 = por %p149, %p150
      %p152 = scmp.ne.s32.totalorder %s144, %s147
      %p153 = scmp.eq.s32.totalorder %s18, 0
      %p154 = por %p152, %p153
      %p155 = scmp.ne.s32.totalorder %s144, %s147
      %p156 = scmp.eq.s32.totalorder %s23, 1
      %p157 = por %p155, %p156
      %p158 = scmp.ne.s32.totalorder %s147, %s148
      %p159 = scmp.eq.s32.totalorder %s23, 0
      %p160 = por %p158, %p159
      %p161 = scmp.ne.s32.totalorder %s147, %s148
      %p162 = scmp.eq.s32.totalorder %s24, 1
      %p163 = por %p161, %p162
      %p165 = scmp.ne.s32.totalorder %s148, %s164
      %p166 = scmp.eq.s32.totalorder %s24, 0
      %p167 = por %p165, %p166
      %s169 = sadd.s32 %s168, 1
      %p172 = scmp.eq.s32.totalorder %s18, 1
      %p173 = scmp.ne.s32.totalorder %s168, %s170
      %p174 = scmp.eq.s32.totalorder %s18, 0
      %p175 = por %p173, %p174
      %p176 = scmp.ne.s32.totalorder %s168, %s170
      %p177 = scmp.eq.s32.totalorder %s23, 1
      %p178 = por %p176, %p177
      %p179 = scmp.ne.s32.totalorder %s170, %s171
      %p180 = scmp.eq.s32.totalorder %s23, 0
      %p181 = por %p179, %p180
      %p182 = scmp.ne.s32.totalorder %s170, %s171
      %p183 = scmp.eq.s32.totalorder %s24, 1
      %p184 = por %p182, %p183
      %p186 = scmp.ne.s32.totalorder %s171, %s185
      %p187 = scmp.eq.s32.totalorder %s24, 0
      %p188 = por %p186, %p187
      %s190 = sadd.s32 %s189, 1
      %p193 = scmp.eq.s32.totalorder %s18, 1
      %p194 = scmp.ne.s32.totalorder %s189, %s191
      %p195 = scmp.eq.s32.totalorder %s18, 0
      %p196 = por %p194, %p195
      %p197 = scmp.ne.s32.totalorder %s189, %s191
      %p198 = scmp.eq.s32.totalorder %s23, 1
      %p199 = por %p197, %p198
      %p200 = scmp.ne.s32.totalorder %s191, %s192
      %p201 = scmp.eq.s32.totalorder %s23, 0
      %p202 = por %p200, %p201
      %p203 = scmp.ne.s32.totalorder %s191, %s192
      %p204 = scmp.eq.s32.totalorder %s24, 1
      %p205 = por %p203, %p204
      %p207 = scmp.ne.s32.totalorder %s192, %s206
      %p208 = scmp.eq.s32.totalorder %s24, 0
      %p209 = por %p207, %p208
      %s210 = ssub.s32 %s25, %s37
      %s211 = ssub.s32 %s26, %s33
      %s212 = sor.u32 %s210, %s211
      %p213 = scmp.eq.s32.totalorder %s212, 0
      %s215 = sadd.s32 %s214, 1
      %s216 = scalar_select %p213, %s214, %s215
      %p219 = pneg %p213
      %p220 = scmp.eq.s32.totalorder %s18, 1
      %p221 = por %p219, %p220
      %p222 = scmp.ne.s32.totalorder %s214, %s217
      %p223 = scmp.eq.s32.totalorder %s18, 0
      %p224 = por %p222, %p223
      %p225 = scmp.ne.s32.totalorder %s214, %s217
      %p226 = scmp.eq.s32.totalorder %s23, 1
      %p227 = por %p225, %p226
      %p228 = scmp.ne.s32.totalorder %s217, %s218
      %p229 = scmp.eq.s32.totalorder %s23, 0
      %p230 = por %p228, %p229
      %p231 = scmp.ne.s32.totalorder %s217, %s218
      %p232 = scmp.eq.s32.totalorder %s24, 1
      %p233 = por %p231, %p232
      %p235 = scmp.ne.s32.totalorder %s218, %s234
      %p236 = scmp.eq.s32.totalorder %s24, 0
      %p237 = por %p235, %p236
      %s238 = ssub.s32 %s25, %s37
      %s239 = ssub.s32 %s26, %s33
      %s240 = sor.u32 %s238, %s239
      %p241 = scmp.eq.s32.totalorder %s240, 0
      %s243 = sadd.s32 %s242, 1
      %s244 = scalar_select %p241, %s242, %s243
      %p247 = pneg %p241
      %p248 = scmp.eq.s32.totalorder %s18, 1
      %p249 = por %p247, %p248
      %p250 = scmp.ne.s32.totalorder %s242, %s245
      %p251 = scmp.eq.s32.totalorder %s18, 0
      %p252 = por %p250, %p251
      %p253 = scmp.ne.s32.totalorder %s242, %s245
      %p254 = scmp.eq.s32.totalorder %s23, 1
      %p255 = por %p253, %p254
      %p256 = scmp.ne.s32.totalorder %s245, %s246
      %p257 = scmp.eq.s32.totalorder %s23, 0
      %p258 = por %p256, %p257
      %p259 = scmp.ne.s32.totalorder %s245, %s246
      %p260 = scmp.eq.s32.totalorder %s24, 1
      %p261 = por %p259, %p260
      %p263 = scmp.ne.s32.totalorder %s246, %s262
      %p264 = scmp.eq.s32.totalorder %s24, 0
      %p265 = por %p263, %p264
      %s266 = ssub.s32 %s25, %s37
      %s267 = ssub.s32 %s26, %s33
      %s268 = sor.u32 %s266, %s267
      %p269 = scmp.eq.s32.totalorder %s268, 0
      %s271 = sadd.s32 %s270, 1
      %s272 = scalar_select %p269, %s270, %s271
      %p275 = pneg %p269
      %p276 = scmp.eq.s32.totalorder %s18, 1
      %p277 = por %p275, %p276
      %p278 = scmp.ne.s32.totalorder %s270, %s273
      %p279 = scmp.eq.s32.totalorder %s18, 0
      %p280 = por %p278, %p279
      %p281 = scmp.ne.s32.totalorder %s270, %s273
      %p282 = scmp.eq.s32.totalorder %s23, 1
      %p283 = por %p281, %p282
      %p284 = scmp.ne.s32.totalorder %s273, %s274
      %p285 = scmp.eq.s32.totalorder %s23, 0
      %p286 = por %p284, %p285
      %p287 = scmp.ne.s32.totalorder %s273, %s274
      %p288 = scmp.eq.s32.totalorder %s24, 1
      %p289 = por %p287, %p288
      %p291 = scmp.ne.s32.totalorder %s274, %s290
      %p292 = scmp.eq.s32.totalorder %s24, 0
      %p293 = por %p291, %p292
      %p294 = scmp.le.s32.totalorder 1, %s18
      %p295 = scmp.lt.s32.totalorder %s18, 3
      %p296 = pnand %p294, %p295
      %p297 = pneg %p296
      // Predicated region
      $region9: #{tpu_custom_call.1} parent=5 // pred_check
        _
      $region10: #{tpu_custom_call.1} parent=5 // pred_check_branch
        %299 = sbr.rel (%p296) target = $region12
      $region11: #{tpu_custom_call.1} parent=5 // pred_region
        %s300 = ssub.s32 %s18, 1
        // Predicated region
        $region13: #{tpu_custom_call.1} parent=11 // pred_check
          %p301 = pneg %p82
        $region14: #{tpu_custom_call.1} parent=11 // pred_check_branch
          %303 = sbr.rel (%p301) target = $region16
        $region15: #{tpu_custom_call.1} parent=11 // pred_region
          %s304 = smul.u32 4, %s28
          %p305 = scmp.lt.s32.totalorder %s304, 3
          %s306 = scalar_select %p305, %s304, 3
          %s307 = smul.addr %s306, 4
          %s308 = scalar_lea.vmem %s1, %s307
          %s309 = smul.u32 4, %s28
        $region16: #{tpu_custom_call.1} parent=11 // pred_fallthru
          _
        // Predicated region
        $region17: #{tpu_custom_call.1} parent=11 // pred_check
          %p310 = pneg %p108
        $region18: #{tpu_custom_call.1} parent=11 // pred_check_branch
          %312 = sbr.rel (%p310) target = $region20
        $region19: #{tpu_custom_call.1} parent=11 // pred_region
          %s313 = smul.u32 4, %s28
          %p314 = scmp.lt.s32.totalorder %s313, 3
          %s315 = scalar_select %p314, %s313, 3
          %s316 = smul.addr %s315, 8
          %s317 = scalar_lea.vmem %s2, %s316
          %s318 = smul.u32 4, %s28
        $region20: #{tpu_custom_call.1} parent=11 // pred_fallthru
          _
        // Predicated region
        $region21: #{tpu_custom_call.1} parent=11 // pred_check
          %p319 = pneg %p134
        $region22: #{tpu_custom_call.1} parent=11 // pred_check_branch
          %321 = sbr.rel (%p319) target = $region24
        $region23: #{tpu_custom_call.1} parent=11 // pred_region
          %s322 = smul.u32 4, %s28
          %p323 = scmp.lt.s32.totalorder %s322, 3
          %s324 = scalar_select %p323, %s322, 3
          %s325 = smul.addr %s324, 8
          %s326 = scalar_lea.vmem %s3, %s325
          %s327 = smul.u32 4, %s28
        $region24: #{tpu_custom_call.1} parent=11 // pred_fallthru
          _
        // Predicated region
        $region25: #{tpu_custom_call.1} parent=11 // pred_check
          %p328 = pneg %p160
        $region26: #{tpu_custom_call.1} parent=11 // pred_check_branch
          %330 = sbr.rel (%p328) target = $region28
        $region27: #{tpu_custom_call.1} parent=11 // pred_region
          %s331 = smul.u32 4, %s28
          %p332 = scmp.lt.s32.totalorder %s331, 3
          %s333 = scalar_select %p332, %s331, 3
          %s334 = smul.addr %s333, 8
          %s335 = scalar_lea.vmem %s4, %s334
          %s336 = smul.u32 4, %s28
        $region28: #{tpu_custom_call.1} parent=11 // pred_fallthru
          _
        // Predicated region
        $region29: #{tpu_custom_call.1} parent=11 // pred_check
          %p337 = pneg %p181
        $region30: #{tpu_custom_call.1} parent=11 // pred_check_branch
          %339 = sbr.rel (%p337) target = $region32
        $region31: #{tpu_custom_call.1} parent=11 // pred_region
          _
        $region32: #{tpu_custom_call.1} parent=11 // pred_fallthru
          _
        // Predicated region
        $region33: #{tpu_custom_call.1} parent=11 // pred_check
          %p340 = pneg %p202
        $region34: #{tpu_custom_call.1} parent=11 // pred_check_branch
          %342 = sbr.rel (%p340) target = $region36
        $region35: #{tpu_custom_call.1} parent=11 // pred_region
          _
        $region36: #{tpu_custom_call.1} parent=11 // pred_fallthru
          _
      $region12: #{tpu_custom_call.1} parent=5 // pred_fallthru
        _
      %p343 = scmp.lt.s32.totalorder %s18, 2
      // Predicated region
      $region37: #{tpu_custom_call.1} parent=5 // pred_check
        %p344 = pneg %p343
      $region38: #{tpu_custom_call.1} parent=5 // pred_check_branch
        %346 = sbr.rel (%p344) target = $region40
      $region39: #{tpu_custom_call.1} parent=5 // pred_region
        // Predicated region
        $region41: #{tpu_custom_call.1} parent=39 // pred_check
          %p347 = pneg %p50
        $region42: #{tpu_custom_call.1} parent=39 // pred_check_branch
          %349 = sbr.rel (%p347) target = $region44
        $region43: #{tpu_custom_call.1} parent=39 // pred_region
          %p350 = scmp.lt.s32.totalorder %s25, 1
          %s351 = scalar_select %p350, %s25, 1
          %s352 = smul.addr %s351, 2
          %s353 = smul.addr %s352, 8
          %s354 = scalar_lea.vmem %s0, %s353
        $region44: #{tpu_custom_call.1} parent=39 // pred_fallthru
          _
        // Predicated region
        $region45: #{tpu_custom_call.1} parent=39 // pred_check
          %p355 = pneg %p224
        $region46: #{tpu_custom_call.1} parent=39 // pred_check_branch
          %357 = sbr.rel (%p355) target = $region48
        $region47: #{tpu_custom_call.1} parent=39 // pred_region
          %s358 = smul.u32 4, %s26
          %p359 = scmp.lt.s32.totalorder %s25, 1
          %s360 = scalar_select %p359, %s25, 1
          %p361 = scmp.lt.s32.totalorder %s358, 3
          %s362 = scalar_select %p361, %s358, 3
          %s363 = smul.addr %s360, 4
          %s364 = sadd.s32 %s362, %s363
          %s365 = smul.addr %s364, 8
          %s366 = scalar_lea.vmem %s7, %s365
          %s367 = smul.u32 4, %s26
        $region48: #{tpu_custom_call.1} parent=39 // pred_fallthru
          _
        // Predicated region
        $region49: #{tpu_custom_call.1} parent=39 // pred_check
          %p368 = pneg %p252
        $region50: #{tpu_custom_call.1} parent=39 // pred_check_branch
          %370 = sbr.rel (%p368) target = $region52
        $region51: #{tpu_custom_call.1} parent=39 // pred_region
          %s371 = smul.u32 4, %s26
          %p372 = scmp.lt.s32.totalorder %s25, 1
          %s373 = scalar_select %p372, %s25, 1
          %p374 = scmp.lt.s32.totalorder %s371, 3
          %s375 = scalar_select %p374, %s371, 3
          %s376 = smul.addr %s373, 4
          %s377 = sadd.s32 %s375, %s376
          %s378 = smul.addr %s377, 8
          %s379 = scalar_lea.vmem %s8, %s378
          %s380 = smul.u32 4, %s26
        $region52: #{tpu_custom_call.1} parent=39 // pred_fallthru
          _
      $region40: #{tpu_custom_call.1} parent=5 // pred_fallthru
        _
      %p381 = scmp.le.s32.totalorder 1, %s18
      %p382 = scmp.lt.s32.totalorder %s18, 3
      %p383 = pnand %p381, %p382
      %p384 = pneg %p383
      // Predicated region
      $region53: #{tpu_custom_call.1} parent=5 // pred_check
        _
      $region54: #{tpu_custom_call.1} parent=5 // pred_check_branch
        %386 = sbr.rel (%p383) target = $region56
      $region55: #{tpu_custom_call.1} parent=5 // pred_region
        %s387 = ssub.s32 %s18, 1
        %p388 = scmp.lt.s32.totalorder %s27, 1
        %s389 = scalar_select %p388, %s27, 1
        %s390 = smul.addr %s389, 2
        %s391 = smul.addr %s390, 8
        %s392 = scalar_lea.vmem %s0, %s391
        %p393 = pneg %p56
        %p394 = pneg %p53
        %s395 = smul.u32 4, %s28
        %p396 = scmp.lt.s32.totalorder %s395, 3
        %s397 = scalar_select %p396, %s395, 3
        %s398 = smul.addr %s397, 4
        %s399 = scalar_lea.vmem %s1, %s398
        %p400 = pneg %p82
        %p401 = pneg %p79
        %s402 = smul.u32 4, %s28
        %p403 = scmp.lt.s32.totalorder %s402, 3
        %s404 = scalar_select %p403, %s402, 3
        %s405 = smul.addr %s404, 8
        %s406 = scalar_lea.vmem %s2, %s405
        %p407 = pneg %p108
        %p408 = pneg %p105
        %s409 = smul.u32 4, %s28
        %p410 = scmp.lt.s32.totalorder %s409, 3
        %s411 = scalar_select %p410, %s409, 3
        %s412 = smul.addr %s411, 8
        %s413 = scalar_lea.vmem %s3, %s412
        %p414 = pneg %p134
        %p415 = pneg %p131
        %s416 = smul.u32 4, %s28
        %p417 = scmp.lt.s32.totalorder %s416, 3
        %s418 = scalar_select %p417, %s416, 3
        %s419 = smul.addr %s418, 8
        %s420 = scalar_lea.vmem %s4, %s419
        %p421 = pneg %p160
        %p422 = pneg %p157
        %p423 = pneg %p181
        %p424 = pneg %p178
        %p425 = pneg %p202
        %p426 = pneg %p199
        %s427 = smul.u32 4, %s28
        %p428 = scmp.lt.s32.totalorder %s27, 1
        %s429 = scalar_select %p428, %s27, 1
        %p430 = scmp.lt.s32.totalorder %s427, 3
        %s431 = scalar_select %p430, %s427, 3
        %s432 = smul.addr %s429, 4
        %s433 = sadd.s32 %s431, %s432
        %s434 = smul.addr %s433, 8
        %s435 = scalar_lea.vmem %s7, %s434
        %p436 = pneg %p230
        %p437 = pneg %p227
        %s438 = smul.u32 4, %s28
        %p439 = scmp.lt.s32.totalorder %s27, 1
        %s440 = scalar_select %p439, %s27, 1
        %p441 = scmp.lt.s32.totalorder %s438, 3
        %s442 = scalar_select %p441, %s438, 3
        %s443 = smul.addr %s440, 4
        %s444 = sadd.s32 %s442, %s443
        %s445 = smul.addr %s444, 8
        %s446 = scalar_lea.vmem %s8, %s445
        %p447 = pneg %p258
        %p448 = pneg %p255
        %p449 = pneg %p286
        %p450 = pneg %p283
        %s451 = sand.u32 %s273, 1
        %s452 = scalar_lea.sflag [#allocation3], %s451
        %s453 = sand.u32 %s273, 1
        %s454 = smul.addr %s453, 64
        %s455 = scalar_lea.vmem [#allocation2], %s454
        %p456 = scmp.lt.s32.totalorder %s27, 1
        %s457 = scalar_select %p456, %s27, 1
        %s458 = smul.addr %s457, 2
        %s459 = smul.addr %s458, 8
        %s460 = scalar_lea.vmem %s0, %s459
        %s461 = smul.u32 4, %s28
        %p462 = scmp.lt.s32.totalorder %s461, 3
        %s463 = scalar_select %p462, %s461, 3
        %s464 = smul.addr %s463, 4
        %s465 = scalar_lea.vmem %s1, %s464
        %s466 = smul.u32 4, %s28
        %s467 = smul.u32 4, %s28
        %p468 = scmp.lt.s32.totalorder %s467, 3
        %s469 = scalar_select %p468, %s467, 3
        %s470 = smul.addr %s469, 8
        %s471 = scalar_lea.vmem %s2, %s470
        %s472 = smul.u32 4, %s28
        %s473 = smul.u32 4, %s28
        %p474 = scmp.lt.s32.totalorder %s473, 3
        %s475 = scalar_select %p474, %s473, 3
        %s476 = smul.addr %s475, 8
        %s477 = scalar_lea.vmem %s3, %s476
        %s478 = smul.u32 4, %s28
        %s479 = smul.u32 4, %s28
        %p480 = scmp.lt.s32.totalorder %s479, 3
        %s481 = scalar_select %p480, %s479, 3
        %s482 = smul.addr %s481, 8
        %s483 = scalar_lea.vmem %s4, %s482
        %s484 = smul.u32 4, %s28
        %s485 = smul.u32 4, %s28
        %p486 = scmp.lt.s32.totalorder %s27, 1
        %s487 = scalar_select %p486, %s27, 1
        %p488 = scmp.lt.s32.totalorder %s485, 3
        %s489 = scalar_select %p488, %s485, 3
        %s490 = smul.addr %s487, 4
        %s491 = sadd.s32 %s489, %s490
        %s492 = smul.addr %s491, 8
        %s493 = scalar_lea.vmem %s7, %s492
        %s494 = smul.u32 4, %s28
        %s495 = smul.u32 4, %s28
        %p496 = scmp.lt.s32.totalorder %s27, 1
        %s497 = scalar_select %p496, %s27, 1
        %p498 = scmp.lt.s32.totalorder %s495, 3
        %s499 = scalar_select %p498, %s495, 3
        %s500 = smul.addr %s497, 4
        %s501 = sadd.s32 %s499, %s500
        %s502 = smul.addr %s501, 8
        %s503 = scalar_lea.vmem %s8, %s502
        %s504 = smul.u32 4, %s28
        %s505 = smul.u32 4, %s28
        %v507 = vld [vmem:[%s460] sm:$0xff]
        %v508 = vld [vmem:[%s460 + $0x8] sm:$0xff]
        %v509 = vld [vmem:[%s5] sm:$0xff]
        %v510 = vld [vmem:[%s5 + $0x8] sm:$0xff]
        %v511 = vld [vmem:[%s5 + $0x10] sm:$0x1]
        %v512 = vld [vmem:[%s5 + $0x18] sm:$0x1]
        %513 = vrot.lane.b32.xlu0 %v507, 17
        %v514 = vpop.permute.xlu0 %513
        %515 = vrot.lane.b32.xlu0 %v508, 17
        %v516 = vpop.permute.xlu0 %515
        %v517 = vlaneseq
        %v518 = vand.u32 %v517, 127
        %vm519 = vcmp.lt.s32.totalorder %v518, 17
        %v520 = vsel %vm519, %v514, %v516
        %v521 = vsel %vm519, %v516, %v514
        %v522 = vperm.slane %v509, 0
        %v523 = vperm.slane %v510, 0
        %v524 = vmul.f32 %v521, %v522
        %v525 = vmul.f32 %v520, %v523
        %v526 = vld [vmem:[%s465] sm:$0xf]
        %v527 = vld [vmem:[%s465 + $0x4] sm:$0xf]
        %v528 = vld [vmem:[%s465 + $0x8] sm:$0xf]
        %v529 = vld [vmem:[%s465 + $0xc] sm:$0xf]
        %v530 = vpack.c.bf16 %v524, %v524
        %v531 = vpack.c.bf16 %v525, %v525
        %532 = vrot.lane.b32.xlu0 %v507, 16
        %v533 = vpop.permute.xlu0 %532
        %534 = vrot.lane.b32.xlu0 %v508, 16
        %v535 = vpop.permute.xlu0 %534
        %vm536 = vcmp.lt.s32.totalorder %v518, 16
        %v537 = vsel %vm536, %v533, %v535
        %v538 = vsel %vm536, %v535, %v533
        %v539 = vperm.slane %v509, 1
        %v540 = vperm.slane %v510, 1
        %v541 = vmul.f32 %v538, %v539
        %v542 = vmul.f32 %v537, %v540
        %s543 = scalar_lea.vmem %s465, 16
        %v544 = vld [vmem:[%s543] sm:$0xf]
        %v545 = vld [vmem:[%s543 + $0x4] sm:$0xf]
        %v546 = vld [vmem:[%s543 + $0x8] sm:$0xf]
        %v547 = vld [vmem:[%s543 + $0xc] sm:$0xf]
        %v548 = vpack.c.bf16 %v541, %v541
        %v549 = vpack.c.bf16 %v542, %v542
        %v554 = vunpack.c.l.b16 %v544
        %v555 = vunpack.c.l.b16 %v545
        %v556 = vunpack.c.l.b16 %v546
        %v557 = vunpack.c.l.b16 %v547
        %v558 = vpack.c.b16 %v555, %v554
        %v559 = vpack.c.b16 %v557, %v556
        %vm560 = vcmask 64512
        %v562 = vsel %vm560, %v558, 0
        %v565 = vsel %vm560, %v559, 0
        %vm567 = vcmask 1043456
        %v569 = vsel %vm567, %v548, 0
        %v572 = vsel %vm567, %v549, 0
        %574 = vmatpush.bf16.msra.mxu0 0
        %575 = vmatpush.bf16.msra.mxu0 0
        %576 = vmatpush.bf16.msra.mxu0 0
        %577 = vmatpush.bf16.msra.mxu0 0
        %578 = vmatpush.bf16.msra.mxu0 0
        %579 = vmatpush.bf16.msra.mxu0 0
        %580 = vmatpush.bf16.msra.mxu0 0
        %581 = vmatpush.bf16.msra.mxu0 %v569
        %582 = vmatmul.bf16.gmra.mxu0 %v562
        %v583 = vpop.f32.mrf.mxu0
        %v584 = vadd.f32 0.0, %v583
        %v585 = vpop.f32.mrf.mxu0
        %v586 = vadd.f32 0.0, %v585
        %587 = vmatmul.bf16.gmra.mxu0 %v565
        %v588 = vpop.f32.mrf.mxu0
        %v589 = vadd.f32 0.0, %v588
        %v590 = vpop.f32.mrf.mxu0
        %v591 = vadd.f32 0.0, %v590
        %592 = vdwg.mxu0
        %593 = vmatpush.bf16.msra.mxu0 0
        %594 = vmatpush.bf16.msra.mxu0 0
        %595 = vmatpush.bf16.msra.mxu0 0
        %596 = vmatpush.bf16.msra.mxu0 0
        %597 = vmatpush.bf16.msra.mxu0 0
        %598 = vmatpush.bf16.msra.mxu0 0
        %599 = vmatpush.bf16.msra.mxu0 0
        %600 = vmatpush.bf16.msra.mxu0 %v572
        %601 = vmatmul.bf16.gmra.mxu0 %v562
        %v602 = vpop.f32.mrf.mxu0
        %v603 = vadd.f32 0.0, %v602
        %v604 = vpop.f32.mrf.mxu0
        %v605 = vadd.f32 0.0, %v604
        %606 = vmatmul.bf16.gmra.mxu0 %v565
        %v607 = vpop.f32.mrf.mxu0
        %v608 = vadd.f32 0.0, %v607
        %v609 = vpop.f32.mrf.mxu0
        %v610 = vadd.f32 0.0, %v609
        %611 = vdwg.mxu0
        %v616 = vunpack.c.l.b16 %v526
        %v617 = vunpack.c.l.b16 %v527
        %v618 = vunpack.c.l.b16 %v528
        %v619 = vunpack.c.l.b16 %v529
        %v620 = vpack.c.b16 %v617, %v616
        %v621 = vpack.c.b16 %v619, %v618
        %v623 = vsel %vm560, %v620, 0
        %v626 = vsel %vm560, %v621, 0
        %v629 = vsel %vm567, %v530, 0
        %v632 = vsel %vm567, %v531, 0
        %634 = vmatpush.bf16.msra.mxu0 0
        %635 = vmatpush.bf16.msra.mxu0 0
        %636 = vmatpush.bf16.msra.mxu0 0
        %637 = vmatpush.bf16.msra.mxu0 0
        %638 = vmatpush.bf16.msra.mxu0 0
        %639 = vmatpush.bf16.msra.mxu0 0
        %640 = vmatpush.bf16.msra.mxu0 0
        %641 = vmatpush.bf16.msra.mxu0 %v629
        %642 = vmatmul.bf16.gmra.mxu0 %v623
        %v643 = vpop.f32.mrf.mxu0
        %v644 = vadd.f32 %v584, %v643
        %v645 = vpop.f32.mrf.mxu0
        %v646 = vadd.f32 %v586, %v645
        %647 = vmatmul.bf16.gmra.mxu0 %v626
        %v648 = vpop.f32.mrf.mxu0
        %v649 = vadd.f32 %v589, %v648
        %v650 = vpop.f32.mrf.mxu0
        %v651 = vadd.f32 %v591, %v650
        %652 = vdwg.mxu0
        %653 = vmatpush.bf16.msra.mxu0 0
        %654 = vmatpush.bf16.msra.mxu0 0
        %655 = vmatpush.bf16.msra.mxu0 0
        %656 = vmatpush.bf16.msra.mxu0 0
        %657 = vmatpush.bf16.msra.mxu0 0
        %658 = vmatpush.bf16.msra.mxu0 0
        %659 = vmatpush.bf16.msra.mxu0 0
        %660 = vmatpush.bf16.msra.mxu0 %v632
        %661 = vmatmul.bf16.gmra.mxu0 %v623
        %v662 = vpop.f32.mrf.mxu0
        %v663 = vadd.f32 %v603, %v662
        %v664 = vpop.f32.mrf.mxu0
        %v665 = vadd.f32 %v605, %v664
        %666 = vmatmul.bf16.gmra.mxu0 %v626
        %v667 = vpop.f32.mrf.mxu0
        %v668 = vadd.f32 %v608, %v667
        %v669 = vpop.f32.mrf.mxu0
        %v670 = vadd.f32 %v610, %v669
        %671 = vdwg.mxu0
        %672 = vrot.lane.b32.xlu0 %v507, 15
        %v673 = vpop.permute.xlu0 %672
        %674 = vrot.lane.b32.xlu0 %v508, 15
        %v675 = vpop.permute.xlu0 %674
        %vm676 = vcmp.lt.s32.totalorder %v518, 15
        %v677 = vsel %vm676, %v673, %v675
        %v678 = vsel %vm676, %v675, %v673
        %v679 = vperm.slane %v509, 2
        %v680 = vperm.slane %v510, 2
        %v681 = vmul.f32 %v678, %v679
        %v682 = vmul.f32 %v677, %v680
        %s683 = scalar_lea.vmem %s465, 32
        %v684 = vld [vmem:[%s683] sm:$0xf]
        %v685 = vld [vmem:[%s683 + $0x4] sm:$0xf]
        %v686 = vld [vmem:[%s683 + $0x8] sm:$0xf]
        %v687 = vld [vmem:[%s683 + $0xc] sm:$0xf]
        %v688 = vpack.c.bf16 %v681, %v681
        %v689 = vpack.c.bf16 %v682, %v682
        %v694 = vunpack.c.l.b16 %v684
        %v695 = vunpack.c.l.b16 %v685
        %v696 = vunpack.c.l.b16 %v686
        %v697 = vunpack.c.l.b16 %v687
        %v698 = vpack.c.b16 %v695, %v694
        %v699 = vpack.c.b16 %v697, %v696
        %v701 = vsel %vm560, %v698, 0
        %v704 = vsel %vm560, %v699, 0
        %v707 = vsel %vm567, %v688, 0
        %v710 = vsel %vm567, %v689, 0
        %712 = vmatpush.bf16.msra.mxu0 0
        %713 = vmatpush.bf16.msra.mxu0 0
        %714 = vmatpush.bf16.msra.mxu0 0
        %715 = vmatpush.bf16.msra.mxu0 0
        %716 = vmatpush.bf16.msra.mxu0 0
        %717 = vmatpush.bf16.msra.mxu0 0
        %718 = vmatpush.bf16.msra.mxu0 0
        %719 = vmatpush.bf16.msra.mxu0 %v707
        %720 = vmatmul.bf16.gmra.mxu0 %v701
        %v721 = vpop.f32.mrf.mxu0
        %v722 = vadd.f32 0.0, %v721
        %v723 = vpop.f32.mrf.mxu0
        %v724 = vadd.f32 0.0, %v723
        %725 = vmatmul.bf16.gmra.mxu0 %v704
        %v726 = vpop.f32.mrf.mxu0
        %v727 = vadd.f32 0.0, %v726
        %v728 = vpop.f32.mrf.mxu0
        %v729 = vadd.f32 0.0, %v728
        %730 = vdwg.mxu0
        %731 = vmatpush.bf16.msra.mxu0 0
        %732 = vmatpush.bf16.msra.mxu0 0
        %733 = vmatpush.bf16.msra.mxu0 0
        %734 = vmatpush.bf16.msra.mxu0 0
        %735 = vmatpush.bf16.msra.mxu0 0
        %736 = vmatpush.bf16.msra.mxu0 0
        %737 = vmatpush.bf16.msra.mxu0 0
        %738 = vmatpush.bf16.msra.mxu0 %v710
        %739 = vmatmul.bf16.gmra.mxu0 %v701
        %v740 = vpop.f32.mrf.mxu0
        %v741 = vadd.f32 0.0, %v740
        %v742 = vpop.f32.mrf.mxu0
        %v743 = vadd.f32 0.0, %v742
        %744 = vmatmul.bf16.gmra.mxu0 %v704
        %v745 = vpop.f32.mrf.mxu0
        %v746 = vadd.f32 0.0, %v745
        %v747 = vpop.f32.mrf.mxu0
        %v748 = vadd.f32 0.0, %v747
        %749 = vdwg.mxu0
        %v750 = vadd.f32 %v644, %v722
        %v751 = vadd.f32 %v663, %v741
        %v752 = vadd.f32 %v646, %v724
        %v753 = vadd.f32 %v665, %v743
        %v754 = vadd.f32 %v649, %v727
        %v755 = vadd.f32 %v668, %v746
        %v756 = vadd.f32 %v651, %v729
        %v757 = vadd.f32 %v670, %v748
        %758 = vrot.lane.b32.xlu0 %v507, 1
        %v759 = vpop.permute.xlu0 %758
        %760 = vrot.lane.b32.xlu0 %v508, 1
        %v761 = vpop.permute.xlu0 %760
        %vm762 = vcmp.lt.s32.totalorder %v518, 1
        %v763 = vsel %vm762, %v759, %v761
        %v764 = vsel %vm762, %v761, %v759
        %v765 = vperm.slane %v509, 3
        %v766 = vperm.slane %v510, 3
        %v767 = vmul.f32 %v764, %v765
        %v768 = vmul.f32 %v763, %v766
        %s769 = scalar_lea.vmem %s465, 48
        %v770 = vld [vmem:[%s769] sm:$0xf]
        %v771 = vld [vmem:[%s769 + $0x4] sm:$0xf]
        %v772 = vld [vmem:[%s769 + $0x8] sm:$0xf]
        %v773 = vld [vmem:[%s769 + $0xc] sm:$0xf]
        %v774 = vpack.c.bf16 %v767, %v767
        %v775 = vpack.c.bf16 %v768, %v768
        %v780 = vunpack.c.l.b16 %v770
        %v781 = vunpack.c.l.b16 %v771
        %v782 = vunpack.c.l.b16 %v772
        %v783 = vunpack.c.l.b16 %v773
        %v784 = vpack.c.b16 %v781, %v780
        %v785 = vpack.c.b16 %v783, %v782
        %v787 = vsel %vm560, %v784, 0
        %v790 = vsel %vm560, %v785, 0
        %v793 = vsel %vm567, %v774, 0
        %v796 = vsel %vm567, %v775, 0
        %798 = vmatpush.bf16.msra.mxu0 0
        %799 = vmatpush.bf16.msra.mxu0 0
        %800 = vmatpush.bf16.msra.mxu0 0
        %801 = vmatpush.bf16.msra.mxu0 0
        %802 = vmatpush.bf16.msra.mxu0 0
        %803 = vmatpush.bf16.msra.mxu0 0
        %804 = vmatpush.bf16.msra.mxu0 0
        %805 = vmatpush.bf16.msra.mxu0 %v793
        %806 = vmatmul.bf16.gmra.mxu0 %v787
        %v807 = vpop.f32.mrf.mxu0
        %v808 = vadd.f32 0.0, %v807
        %v809 = vpop.f32.mrf.mxu0
        %v810 = vadd.f32 0.0, %v809
        %811 = vmatmul.bf16.gmra.mxu0 %v790
        %v812 = vpop.f32.mrf.mxu0
        %v813 = vadd.f32 0.0, %v812
        %v814 = vpop.f32.mrf.mxu0
        %v815 = vadd.f32 0.0, %v814
        %816 = vdwg.mxu0
        %817 = vmatpush.bf16.msra.mxu0 0
        %818 = vmatpush.bf16.msra.mxu0 0
        %819 = vmatpush.bf16.msra.mxu0 0
        %820 = vmatpush.bf16.msra.mxu0 0
        %821 = vmatpush.bf16.msra.mxu0 0
        %822 = vmatpush.bf16.msra.mxu0 0
        %823 = vmatpush.bf16.msra.mxu0 0
        %824 = vmatpush.bf16.msra.mxu0 %v796
        %825 = vmatmul.bf16.gmra.mxu0 %v787
        %v826 = vpop.f32.mrf.mxu0
        %v827 = vadd.f32 0.0, %v826
        %v828 = vpop.f32.mrf.mxu0
        %v829 = vadd.f32 0.0, %v828
        %830 = vmatmul.bf16.gmra.mxu0 %v790
        %v831 = vpop.f32.mrf.mxu0
        %v832 = vadd.f32 0.0, %v831
        %v833 = vpop.f32.mrf.mxu0
        %v834 = vadd.f32 0.0, %v833
        %835 = vdwg.mxu0
        %v836 = vadd.f32 %v750, %v808
        %v837 = vadd.f32 %v751, %v827
        %v838 = vadd.f32 %v752, %v810
        %v839 = vadd.f32 %v753, %v829
        %v840 = vadd.f32 %v754, %v813
        %v841 = vadd.f32 %v755, %v832
        %v842 = vadd.f32 %v756, %v815
        %v843 = vadd.f32 %v757, %v834
        %s844 = scalar_lea.vmem %s465, 64
        %v845 = vld [vmem:[%s844] sm:$0xf]
        %v846 = vld [vmem:[%s844 + $0x4] sm:$0xf]
        %v847 = vld [vmem:[%s844 + $0x8] sm:$0xf]
        %v848 = vld [vmem:[%s844 + $0xc] sm:$0xf]
        %v849 = vpack.c.bf16 %v507, %v507
        %v850 = vpack.c.bf16 %v508, %v508
        %v855 = vunpack.c.l.b16 %v845
        %v856 = vunpack.c.l.b16 %v846
        %v857 = vunpack.c.l.b16 %v847
        %v858 = vunpack.c.l.b16 %v848
        %v859 = vpack.c.b16 %v856, %v855
        %v860 = vpack.c.b16 %v858, %v857
        %v862 = vsel %vm560, %v859, 0
        %v865 = vsel %vm560, %v860, 0
        %v868 = vsel %vm567, %v849, 0
        %v871 = vsel %vm567, %v850, 0
        %873 = vmatpush.bf16.msra.mxu0 0
        %874 = vmatpush.bf16.msra.mxu0 0
        %875 = vmatpush.bf16.msra.mxu0 0
        %876 = vmatpush.bf16.msra.mxu0 0
        %877 = vmatpush.bf16.msra.mxu0 0
        %878 = vmatpush.bf16.msra.mxu0 0
        %879 = vmatpush.bf16.msra.mxu0 0
        %880 = vmatpush.bf16.msra.mxu0 %v868
        %881 = vmatmul.bf16.gmra.mxu0 %v862
        %v882 = vpop.f32.mrf.mxu0
        %v883 = vadd.f32 0.0, %v882
        %v884 = vpop.f32.mrf.mxu0
        %v885 = vadd.f32 0.0, %v884
        %886 = vmatmul.bf16.gmra.mxu0 %v865
        %v887 = vpop.f32.mrf.mxu0
        %v888 = vadd.f32 0.0, %v887
        %v889 = vpop.f32.mrf.mxu0
        %v890 = vadd.f32 0.0, %v889
        %891 = vdwg.mxu0
        %892 = vmatpush.bf16.msra.mxu0 0
        %893 = vmatpush.bf16.msra.mxu0 0
        %894 = vmatpush.bf16.msra.mxu0 0
        %895 = vmatpush.bf16.msra.mxu0 0
        %896 = vmatpush.bf16.msra.mxu0 0
        %897 = vmatpush.bf16.msra.mxu0 0
        %898 = vmatpush.bf16.msra.mxu0 0
        %899 = vmatpush.bf16.msra.mxu0 %v871
        %900 = vmatmul.bf16.gmra.mxu0 %v862
        %v901 = vpop.f32.mrf.mxu0
        %v902 = vadd.f32 0.0, %v901
        %v903 = vpop.f32.mrf.mxu0
        %v904 = vadd.f32 0.0, %v903
        %905 = vmatmul.bf16.gmra.mxu0 %v865
        %v906 = vpop.f32.mrf.mxu0
        %v907 = vadd.f32 0.0, %v906
        %v908 = vpop.f32.mrf.mxu0
        %v909 = vadd.f32 0.0, %v908
        %910 = vdwg.mxu0
        %v911 = vadd.f32 %v836, %v883
        %v912 = vadd.f32 %v837, %v902
        %v913 = vadd.f32 %v838, %v885
        %v914 = vadd.f32 %v839, %v904
        %v915 = vadd.f32 %v840, %v888
        %v916 = vadd.f32 %v841, %v907
        %v917 = vadd.f32 %v842, %v890
        %v918 = vadd.f32 %v843, %v909
        %919 = vrot.lane.b32.xlu0 %v507, 127
        %v920 = vpop.permute.xlu0 %919
        %921 = vrot.lane.b32.xlu0 %v508, 127
        %v922 = vpop.permute.xlu0 %921
        %vm923 = vcmp.lt.s32.totalorder %v518, 127
        %v924 = vsel %vm923, %v920, %v922
        %v925 = vsel %vm923, %v922, %v920
        %v926 = vperm.slane %v509, 5
        %v927 = vperm.slane %v510, 5
        %v928 = vmul.f32 %v924, %v926
        %v929 = vmul.f32 %v925, %v927
        %s930 = scalar_lea.vmem %s465, 80
        %v931 = vld [vmem:[%s930] sm:$0xf]
        %v932 = vld [vmem:[%s930 + $0x4] sm:$0xf]
        %v933 = vld [vmem:[%s930 + $0x8] sm:$0xf]
        %v934 = vld [vmem:[%s930 + $0xc] sm:$0xf]
        %v935 = vpack.c.bf16 %v928, %v928
        %v936 = vpack.c.bf16 %v929, %v929
        %v941 = vunpack.c.l.b16 %v931
        %v942 = vunpack.c.l.b16 %v932
        %v943 = vunpack.c.l.b16 %v933
        %v944 = vunpack.c.l.b16 %v934
        %v945 = vpack.c.b16 %v942, %v941
        %v946 = vpack.c.b16 %v944, %v943
        %v948 = vsel %vm560, %v945, 0
        %v951 = vsel %vm560, %v946, 0
        %v954 = vsel %vm567, %v935, 0
        %v957 = vsel %vm567, %v936, 0
        %959 = vmatpush.bf16.msra.mxu0 0
        %960 = vmatpush.bf16.msra.mxu0 0
        %961 = vmatpush.bf16.msra.mxu0 0
        %962 = vmatpush.bf16.msra.mxu0 0
        %963 = vmatpush.bf16.msra.mxu0 0
        %964 = vmatpush.bf16.msra.mxu0 0
        %965 = vmatpush.bf16.msra.mxu0 0
        %966 = vmatpush.bf16.msra.mxu0 %v954
        %967 = vmatmul.bf16.gmra.mxu0 %v948
        %v968 = vpop.f32.mrf.mxu0
        %v969 = vadd.f32 0.0, %v968
        %v970 = vpop.f32.mrf.mxu0
        %v971 = vadd.f32 0.0, %v970
        %972 = vmatmul.bf16.gmra.mxu0 %v951
        %v973 = vpop.f32.mrf.mxu0
        %v974 = vadd.f32 0.0, %v973
        %v975 = vpop.f32.mrf.mxu0
        %v976 = vadd.f32 0.0, %v975
        %977 = vdwg.mxu0
        %978 = vmatpush.bf16.msra.mxu0 0
        %979 = vmatpush.bf16.msra.mxu0 0
        %980 = vmatpush.bf16.msra.mxu0 0
        %981 = vmatpush.bf16.msra.mxu0 0
        %982 = vmatpush.bf16.msra.mxu0 0
        %983 = vmatpush.bf16.msra.mxu0 0
        %984 = vmatpush.bf16.msra.mxu0 0
        %985 = vmatpush.bf16.msra.mxu0 %v957
        %986 = vmatmul.bf16.gmra.mxu0 %v948
        %v987 = vpop.f32.mrf.mxu0
        %v988 = vadd.f32 0.0, %v987
        %v989 = vpop.f32.mrf.mxu0
        %v990 = vadd.f32 0.0, %v989
        %991 = vmatmul.bf16.gmra.mxu0 %v951
        %v992 = vpop.f32.mrf.mxu0
        %v993 = vadd.f32 0.0, %v992
        %v994 = vpop.f32.mrf.mxu0
        %v995 = vadd.f32 0.0, %v994
        %996 = vdwg.mxu0
        %v997 = vadd.f32 %v911, %v969
        %v998 = vadd.f32 %v912, %v988
        %v999 = vadd.f32 %v913, %v971
        %v1000 = vadd.f32 %v914, %v990
        %v1001 = vadd.f32 %v915, %v974
        %v1002 = vadd.f32 %v916, %v993
        %v1003 = vadd.f32 %v917, %v976
        %v1004 = vadd.f32 %v918, %v995
        %1005 = vrot.lane.b32.xlu0 %v507, 113
        %v1006 = vpop.permute.xlu0 %1005
        %1007 = vrot.lane.b32.xlu0 %v508, 113
        %v1008 = vpop.permute.xlu0 %1007
        %vm1009 = vcmp.lt.s32.totalorder %v518, 113
        %v1010 = vsel %vm1009, %v1006, %v1008
        %v1011 = vsel %vm1009, %v1008, %v1006
        %v1012 = vperm.slane %v509, 6
        %v1013 = vperm.slane %v510, 6
        %v1014 = vmul.f32 %v1010, %v1012
        %v1015 = vmul.f32 %v1011, %v1013
        %s1016 = scalar_lea.vmem %s465, 96
        %v1017 = vld [vmem:[%s1016] sm:$0xf]
        %v1018 = vld [vmem:[%s1016 + $0x4] sm:$0xf]
        %v1019 = vld [vmem:[%s1016 + $0x8] sm:$0xf]
        %v1020 = vld [vmem:[%s1016 + $0xc] sm:$0xf]
        %v1021 = vpack.c.bf16 %v1014, %v1014
        %v1022 = vpack.c.bf16 %v1015, %v1015
        %v1027 = vunpack.c.l.b16 %v1017
        %v1028 = vunpack.c.l.b16 %v1018
        %v1029 = vunpack.c.l.b16 %v1019
        %v1030 = vunpack.c.l.b16 %v1020
        %v1031 = vpack.c.b16 %v1028, %v1027
        %v1032 = vpack.c.b16 %v1030, %v1029
        %v1034 = vsel %vm560, %v1031, 0
        %v1037 = vsel %vm560, %v1032, 0
        %v1040 = vsel %vm567, %v1021, 0
        %v1043 = vsel %vm567, %v1022, 0
        %1045 = vmatpush.bf16.msra.mxu0 0
        %1046 = vmatpush.bf16.msra.mxu0 0
        %1047 = vmatpush.bf16.msra.mxu0 0
        %1048 = vmatpush.bf16.msra.mxu0 0
        %1049 = vmatpush.bf16.msra.mxu0 0
        %1050 = vmatpush.bf16.msra.mxu0 0
        %1051 = vmatpush.bf16.msra.mxu0 0
        %1052 = vmatpush.bf16.msra.mxu0 %v1040
        %1053 = vmatmul.bf16.gmra.mxu0 %v1034
        %v1054 = vpop.f32.mrf.mxu0
        %v1055 = vadd.f32 0.0, %v1054
        %v1056 = vpop.f32.mrf.mxu0
        %v1057 = vadd.f32 0.0, %v1056
        %1058 = vmatmul.bf16.gmra.mxu0 %v1037
        %v1059 = vpop.f32.mrf.mxu0
        %v1060 = vadd.f32 0.0, %v1059
        %v1061 = vpop.f32.mrf.mxu0
        %v1062 = vadd.f32 0.0, %v1061
        %1063 = vdwg.mxu0
        %1064 = vmatpush.bf16.msra.mxu0 0
        %1065 = vmatpush.bf16.msra.mxu0 0
        %1066 = vmatpush.bf16.msra.mxu0 0
        %1067 = vmatpush.bf16.msra.mxu0 0
        %1068 = vmatpush.bf16.msra.mxu0 0
        %1069 = vmatpush.bf16.msra.mxu0 0
        %1070 = vmatpush.bf16.msra.mxu0 0
        %1071 = vmatpush.bf16.msra.mxu0 %v1043
        %1072 = vmatmul.bf16.gmra.mxu0 %v1034
        %v1073 = vpop.f32.mrf.mxu0
        %v1074 = vadd.f32 0.0, %v1073
        %v1075 = vpop.f32.mrf.mxu0
        %v1076 = vadd.f32 0.0, %v1075
        %1077 = vmatmul.bf16.gmra.mxu0 %v1037
        %v1078 = vpop.f32.mrf.mxu0
        %v1079 = vadd.f32 0.0, %v1078
        %v1080 = vpop.f32.mrf.mxu0
        %v1081 = vadd.f32 0.0, %v1080
        %1082 = vdwg.mxu0
        %v1083 = vadd.f32 %v997, %v1055
        %v1084 = vadd.f32 %v998, %v1074
        %v1085 = vadd.f32 %v999, %v1057
        %v1086 = vadd.f32 %v1000, %v1076
        %v1087 = vadd.f32 %v1001, %v1060
        %v1088 = vadd.f32 %v1002, %v1079
        %v1089 = vadd.f32 %v1003, %v1062
        %v1090 = vadd.f32 %v1004, %v1081
        %1091 = vrot.lane.b32.xlu0 %v507, 112
        %v1092 = vpop.permute.xlu0 %1091
        %1093 = vrot.lane.b32.xlu0 %v508, 112
        %v1094 = vpop.permute.xlu0 %1093
        %vm1095 = vcmp.lt.s32.totalorder %v518, 112
        %v1096 = vsel %vm1095, %v1092, %v1094
        %v1097 = vsel %vm1095, %v1094, %v1092
        %v1098 = vperm.slane %v509, 7
        %v1099 = vperm.slane %v510, 7
        %v1100 = vmul.f32 %v1096, %v1098
        %v1101 = vmul.f32 %v1097, %v1099
        %s1102 = scalar_lea.vmem %s465, 112
        %v1103 = vld [vmem:[%s1102] sm:$0xf]
        %v1104 = vld [vmem:[%s1102 + $0x4] sm:$0xf]
        %v1105 = vld [vmem:[%s1102 + $0x8] sm:$0xf]
        %v1106 = vld [vmem:[%s1102 + $0xc] sm:$0xf]
        %v1107 = vpack.c.bf16 %v1100, %v1100
        %v1108 = vpack.c.bf16 %v1101, %v1101
        %v1113 = vunpack.c.l.b16 %v1103
        %v1114 = vunpack.c.l.b16 %v1104
        %v1115 = vunpack.c.l.b16 %v1105
        %v1116 = vunpack.c.l.b16 %v1106
        %v1117 = vpack.c.b16 %v1114, %v1113
        %v1118 = vpack.c.b16 %v1116, %v1115
        %v1120 = vsel %vm560, %v1117, 0
        %v1123 = vsel %vm560, %v1118, 0
        %v1126 = vsel %vm567, %v1107, 0
        %v1129 = vsel %vm567, %v1108, 0
        %1131 = vmatpush.bf16.msra.mxu0 0
        %1132 = vmatpush.bf16.msra.mxu0 0
        %1133 = vmatpush.bf16.msra.mxu0 0
        %1134 = vmatpush.bf16.msra.mxu0 0
        %1135 = vmatpush.bf16.msra.mxu0 0
        %1136 = vmatpush.bf16.msra.mxu0 0
        %1137 = vmatpush.bf16.msra.mxu0 0
        %1138 = vmatpush.bf16.msra.mxu0 %v1126
        %1139 = vmatmul.bf16.gmra.mxu0 %v1120
        %v1140 = vpop.f32.mrf.mxu0
        %v1141 = vadd.f32 0.0, %v1140
        %v1142 = vpop.f32.mrf.mxu0
        %v1143 = vadd.f32 0.0, %v1142
        %1144 = vmatmul.bf16.gmra.mxu0 %v1123
        %v1145 = vpop.f32.mrf.mxu0
        %v1146 = vadd.f32 0.0, %v1145
        %v1147 = vpop.f32.mrf.mxu0
        %v1148 = vadd.f32 0.0, %v1147
        %1149 = vdwg.mxu0
        %1150 = vmatpush.bf16.msra.mxu0 0
        %1151 = vmatpush.bf16.msra.mxu0 0
        %1152 = vmatpush.bf16.msra.mxu0 0
        %1153 = vmatpush.bf16.msra.mxu0 0
        %1154 = vmatpush.bf16.msra.mxu0 0
        %1155 = vmatpush.bf16.msra.mxu0 0
        %1156 = vmatpush.bf16.msra.mxu0 0
        %1157 = vmatpush.bf16.msra.mxu0 %v1129
        %1158 = vmatmul.bf16.gmra.mxu0 %v1120
        %v1159 = vpop.f32.mrf.mxu0
        %v1160 = vadd.f32 0.0, %v1159
        %v1161 = vpop.f32.mrf.mxu0
        %v1162 = vadd.f32 0.0, %v1161
        %1163 = vmatmul.bf16.gmra.mxu0 %v1123
        %v1164 = vpop.f32.mrf.mxu0
        %v1165 = vadd.f32 0.0, %v1164
        %v1166 = vpop.f32.mrf.mxu0
        %v1167 = vadd.f32 0.0, %v1166
        %1168 = vdwg.mxu0
        %v1169 = vadd.f32 %v1083, %v1141
        %v1170 = vadd.f32 %v1084, %v1160
        %v1171 = vadd.f32 %v1085, %v1143
        %v1172 = vadd.f32 %v1086, %v1162
        %v1173 = vadd.f32 %v1087, %v1146
        %v1174 = vadd.f32 %v1088, %v1165
        %v1175 = vadd.f32 %v1089, %v1148
        %v1176 = vadd.f32 %v1090, %v1167
        %1177 = vrot.lane.b32.xlu0 %v507, 111
        %v1178 = vpop.permute.xlu0 %1177
        %1179 = vrot.lane.b32.xlu0 %v508, 111
        %v1180 = vpop.permute.xlu0 %1179
        %vm1181 = vcmp.lt.s32.totalorder %v518, 111
        %v1182 = vsel %vm1181, %v1178, %v1180
        %v1183 = vsel %vm1181, %v1180, %v1178
        %v1184 = vperm.slane %v511, 0
        %v1185 = vperm.slane %v512, 0
        %v1186 = vmul.f32 %v1182, %v1184
        %v1187 = vmul.f32 %v1183, %v1185
        %s1188 = scalar_lea.vmem %s465, 128
        %v1189 = vld [vmem:[%s1188] sm:$0xf]
        %v1190 = vld [vmem:[%s1188 + $0x4] sm:$0xf]
        %v1191 = vld [vmem:[%s1188 + $0x8] sm:$0xf]
        %v1192 = vld [vmem:[%s1188 + $0xc] sm:$0xf]
        %v1193 = vpack.c.bf16 %v1186, %v1186
        %v1194 = vpack.c.bf16 %v1187, %v1187
        %v1199 = vunpack.c.l.b16 %v1189
        %v1200 = vunpack.c.l.b16 %v1190
        %v1201 = vunpack.c.l.b16 %v1191
        %v1202 = vunpack.c.l.b16 %v1192
        %v1203 = vpack.c.b16 %v1200, %v1199
        %v1204 = vpack.c.b16 %v1202, %v1201
        %v1206 = vsel %vm560, %v1203, 0
        %v1209 = vsel %vm560, %v1204, 0
        %v1212 = vsel %vm567, %v1193, 0
        %v1215 = vsel %vm567, %v1194, 0
        %1217 = vmatpush.bf16.msra.mxu0 0
        %1218 = vmatpush.bf16.msra.mxu0 0
        %1219 = vmatpush.bf16.msra.mxu0 0
        %1220 = vmatpush.bf16.msra.mxu0 0
        %1221 = vmatpush.bf16.msra.mxu0 0
        %1222 = vmatpush.bf16.msra.mxu0 0
        %1223 = vmatpush.bf16.msra.mxu0 0
        %1224 = vmatpush.bf16.msra.mxu0 %v1212
        %1225 = vmatmul.bf16.gmra.mxu0 %v1206
        %v1226 = vpop.f32.mrf.mxu0
        %v1227 = vadd.f32 0.0, %v1226
        %v1228 = vpop.f32.mrf.mxu0
        %v1229 = vadd.f32 0.0, %v1228
        %1230 = vmatmul.bf16.gmra.mxu0 %v1209
        %v1231 = vpop.f32.mrf.mxu0
        %v1232 = vadd.f32 0.0, %v1231
        %v1233 = vpop.f32.mrf.mxu0
        %v1234 = vadd.f32 0.0, %v1233
        %1235 = vdwg.mxu0
        %1236 = vmatpush.bf16.msra.mxu0 0
        %1237 = vmatpush.bf16.msra.mxu0 0
        %1238 = vmatpush.bf16.msra.mxu0 0
        %1239 = vmatpush.bf16.msra.mxu0 0
        %1240 = vmatpush.bf16.msra.mxu0 0
        %1241 = vmatpush.bf16.msra.mxu0 0
        %1242 = vmatpush.bf16.msra.mxu0 0
        %1243 = vmatpush.bf16.msra.mxu0 %v1215
        %1244 = vmatmul.bf16.gmra.mxu0 %v1206
        %v1245 = vpop.f32.mrf.mxu0
        %v1246 = vadd.f32 0.0, %v1245
        %v1247 = vpop.f32.mrf.mxu0
        %v1248 = vadd.f32 0.0, %v1247
        %1249 = vmatmul.bf16.gmra.mxu0 %v1209
        %v1250 = vpop.f32.mrf.mxu0
        %v1251 = vadd.f32 0.0, %v1250
        %v1252 = vpop.f32.mrf.mxu0
        %v1253 = vadd.f32 0.0, %v1252
        %1254 = vdwg.mxu0
        %v1255 = vadd.f32 %v1169, %v1227
        %v1256 = vadd.f32 %v1170, %v1246
        %v1257 = vadd.f32 %v1171, %v1229
        %v1258 = vadd.f32 %v1172, %v1248
        %v1259 = vadd.f32 %v1173, %v1232
        %v1260 = vadd.f32 %v1174, %v1251
        %v1261 = vadd.f32 %v1175, %v1234
        %v1262 = vadd.f32 %v1176, %v1253
        %v1263 = vadd.f32 %v1255, %v1256
        %1264 = vadd.xlane.f32.xlu0 %v1263
        %v1265 = vpop.xlane.xlu0 %1264
        %v1266 = vadd.f32 %v1257, %v1258
        %1267 = vadd.xlane.f32.xlu0 %v1266
        %v1268 = vpop.xlane.xlu0 %1267
        %v1269 = vadd.f32 %v1259, %v1260
        %1270 = vadd.xlane.f32.xlu0 %v1269
        %v1271 = vpop.xlane.xlu0 %1270
        %v1272 = vadd.f32 %v1261, %v1262
        %1273 = vadd.xlane.f32.xlu0 %v1272
        %v1274 = vpop.xlane.xlu0 %1273
        %v1275 = vmul.f32 %v1255, %v1255
        %v1276 = vmul.f32 %v1256, %v1256
        %v1277 = vmul.f32 %v1257, %v1257
        %v1278 = vmul.f32 %v1258, %v1258
        %v1279 = vmul.f32 %v1259, %v1259
        %v1280 = vmul.f32 %v1260, %v1260
        %v1281 = vmul.f32 %v1261, %v1261
        %v1282 = vmul.f32 %v1262, %v1262
        %v1283 = vadd.f32 %v1275, %v1276
        %1284 = vadd.xlane.f32.xlu0 %v1283
        %v1285 = vpop.xlane.xlu0 %1284
        %v1286 = vadd.f32 %v1277, %v1278
        %1287 = vadd.xlane.f32.xlu0 %v1286
        %v1288 = vpop.xlane.xlu0 %1287
        %v1289 = vadd.f32 %v1279, %v1280
        %1290 = vadd.xlane.f32.xlu0 %v1289
        %v1291 = vpop.xlane.xlu0 %1290
        %v1292 = vadd.f32 %v1281, %v1282
        %1293 = vadd.xlane.f32.xlu0 %v1292
        %v1294 = vpop.xlane.xlu0 %1293
        %v1295 = vld [vmem:[%s471] sm:$0xff]
        %v1296 = vld [vmem:[%s471 + $0x8] sm:$0xff]
        %v1297 = vld [vmem:[%s471 + $0x10] sm:$0xff]
        %v1298 = vld [vmem:[%s471 + $0x18] sm:$0xff]
        %v1299 = vmul.f32 %v1295, 256.0
        %v1300 = vmul.f32 %v1296, 256.0
        %v1301 = vmul.f32 %v1297, 256.0
        %v1302 = vmul.f32 %v1298, 256.0
        %v1303 = vadd.f32 %v1265, %v1299
        %v1304 = vadd.f32 %v1268, %v1300
        %v1305 = vadd.f32 %v1271, %v1301
        %v1306 = vadd.f32 %v1274, %v1302
        %v1307 = vmul.f32 %v1295, 2.0
        %v1308 = vmul.f32 %v1296, 2.0
        %v1309 = vmul.f32 %v1297, 2.0
        %v1310 = vmul.f32 %v1298, 2.0
        %v1311 = vmul.f32 %v1307, %v1265
        %v1312 = vmul.f32 %v1308, %v1268
        %v1313 = vmul.f32 %v1309, %v1271
        %v1314 = vmul.f32 %v1310, %v1274
        %v1315 = vadd.f32 %v1285, %v1311
        %v1316 = vadd.f32 %v1288, %v1312
        %v1317 = vadd.f32 %v1291, %v1313
        %v1318 = vadd.f32 %v1294, %v1314
        %v1319 = vmul.f32 %v1299, %v1295
        %v1320 = vmul.f32 %v1300, %v1296
        %v1321 = vmul.f32 %v1301, %v1297
        %v1322 = vmul.f32 %v1302, %v1298
        %v1323 = vadd.f32 %v1315, %v1319
        %v1324 = vadd.f32 %v1316, %v1320
        %v1325 = vadd.f32 %v1317, %v1321
        %v1326 = vadd.f32 %v1318, %v1322
        %v1327 = vld [vmem:[%s6] sm:$0xff]
        %v1328 = vld [vmem:[%s6 + $0x8] sm:$0xff]
        %v1329 = vld [vmem:[%s6 + $0x10] sm:$0xff]
        %v1330 = vld [vmem:[%s6 + $0x18] sm:$0xff]
        %vm1331 = vcmask 261120
        %v1333 = vsel %vm1331, %v1327, 0
        %v1336 = vsel %vm1331, %v1328, 0
        %v1339 = vsel %vm1331, %v1329, 0
        %v1342 = vsel %vm1331, %v1330, 0
        %1344 = vmatpush.msra.mxu0 0.0
        %1345 = vmatpush.msra.mxu0 0.0
        %1346 = vmatpush.msra.mxu0 0.0
        %1347 = vmatpush.msra.mxu0 0.0
        %1348 = vmatpush.msra.mxu0 0.0
        %1349 = vmatpush.msra.mxu0 0.0
        %1350 = vmatpush.msra.mxu0 0.0
        %1351 = vmatpush.msra.mxu0 0.0
        %1352 = vmatpush.msra.mxu0 0.0
        %1353 = vmatpush.msra.mxu0 0.0
        %1354 = vmatpush.msra.mxu0 0.0
        %1355 = vmatpush.msra.mxu0 0.0
        %v1356 = vand.u32 %v1306, 4294901760
        %1357 = vmatpush.msra.mxu0 %v1356
        %v1358 = vand.u32 %v1305, 4294901760
        %1359 = vmatpush.msra.mxu0 %v1358
        %v1360 = vand.u32 %v1304, 4294901760
        %1361 = vmatpush.msra.mxu0 %v1360
        %v1362 = vand.u32 %v1303, 4294901760
        %1363 = vmatpush.msra.mxu0 %v1362
        %v1364 = vand.u32 %v1333, 4294901760
        %v1365 = vsub.f32 %v1333, %v1364
        %v1366 = vand.u32 %v1365, 4294901760
        %v1367 = vsub.f32 %v1365, %v1366
        %v1368 = vand.u32 %v1367, 4294901760
        %1369 = vmatmul.f32.gmra.mxu0 %v1368
        %v1370 = vpop.f32.mrf.mxu0
        %v1371 = vadd.f32 0.0, %v1370
        %v1372 = vand.u32 %v1336, 4294901760
        %v1373 = vsub.f32 %v1336, %v1372
        %v1374 = vand.u32 %v1373, 4294901760
        %v1375 = vsub.f32 %v1373, %v1374
        %v1376 = vand.u32 %v1375, 4294901760
        %1377 = vmatmul.f32.gmra.mxu0 %v1376
        %v1378 = vpop.f32.mrf.mxu0
        %v1379 = vadd.f32 0.0, %v1378
        %v1380 = vand.u32 %v1339, 4294901760
        %v1381 = vsub.f32 %v1339, %v1380
        %v1382 = vand.u32 %v1381, 4294901760
        %v1383 = vsub.f32 %v1381, %v1382
        %v1384 = vand.u32 %v1383, 4294901760
        %1385 = vmatmul.f32.gmra.mxu0 %v1384
        %v1386 = vpop.f32.mrf.mxu0
        %v1387 = vadd.f32 0.0, %v1386
        %v1388 = vand.u32 %v1342, 4294901760
        %v1389 = vsub.f32 %v1342, %v1388
        %v1390 = vand.u32 %v1389, 4294901760
        %v1391 = vsub.f32 %v1389, %v1390
        %v1392 = vand.u32 %v1391, 4294901760
        %1393 = vmatmul.f32.gmra.mxu0 %v1392
        %v1394 = vpop.f32.mrf.mxu0
        %v1395 = vadd.f32 0.0, %v1394
        %1396 = vdwg.mxu0
        %1397 = vmatpush.msra.mxu0 0.0
        %1398 = vmatpush.msra.mxu0 0.0
        %1399 = vmatpush.msra.mxu0 0.0
        %1400 = vmatpush.msra.mxu0 0.0
        %1401 = vmatpush.msra.mxu0 0.0
        %1402 = vmatpush.msra.mxu0 0.0
        %1403 = vmatpush.msra.mxu0 0.0
        %1404 = vmatpush.msra.mxu0 0.0
        %1405 = vmatpush.msra.mxu0 0.0
        %1406 = vmatpush.msra.mxu0 0.0
        %1407 = vmatpush.msra.mxu0 0.0
        %1408 = vmatpush.msra.mxu0 0.0
        %v1409 = vand.u32 %v1306, 4294901760
        %v1410 = vsub.f32 %v1306, %v1409
        %v1411 = vand.u32 %v1410, 4294901760
        %v1412 = vsub.f32 %v1410, %v1411
        %v1413 = vand.u32 %v1412, 4294901760
        %1414 = vmatpush.msra.mxu0 %v1413
        %v1415 = vand.u32 %v1305, 4294901760
        %v1416 = vsub.f32 %v1305, %v1415
        %v1417 = vand.u32 %v1416, 4294901760
        %v1418 = vsub.f32 %v1416, %v1417
        %v1419 = vand.u32 %v1418, 4294901760
        %1420 = vmatpush.msra.mxu0 %v1419
        %v1421 = vand.u32 %v1304, 4294901760
        %v1422 = vsub.f32 %v1304, %v1421
        %v1423 = vand.u32 %v1422, 4294901760
        %v1424 = vsub.f32 %v1422, %v1423
        %v1425 = vand.u32 %v1424, 4294901760
        %1426 = vmatpush.msra.mxu0 %v1425
        %v1427 = vand.u32 %v1303, 4294901760
        %v1428 = vsub.f32 %v1303, %v1427
        %v1429 = vand.u32 %v1428, 4294901760
        %v1430 = vsub.f32 %v1428, %v1429
        %v1431 = vand.u32 %v1430, 4294901760
        %1432 = vmatpush.msra.mxu0 %v1431
        %v1433 = vand.u32 %v1333, 4294901760
        %1434 = vmatmul.f32.gmra.mxu0 %v1433
        %v1435 = vpop.f32.mrf.mxu0
        %v1436 = vadd.f32 %v1371, %v1435
        %v1437 = vand.u32 %v1336, 4294901760
        %1438 = vmatmul.f32.gmra.mxu0 %v1437
        %v1439 = vpop.f32.mrf.mxu0
        %v1440 = vadd.f32 %v1379, %v1439
        %v1441 = vand.u32 %v1339, 4294901760
        %1442 = vmatmul.f32.gmra.mxu0 %v1441
        %v1443 = vpop.f32.mrf.mxu0
        %v1444 = vadd.f32 %v1387, %v1443
        %v1445 = vand.u32 %v1342, 4294901760
        %1446 = vmatmul.f32.gmra.mxu0 %v1445
        %v1447 = vpop.f32.mrf.mxu0
        %v1448 = vadd.f32 %v1395, %v1447
        %1449 = vdwg.mxu0
        %1450 = vmatpush.msra.mxu0 0.0
        %1451 = vmatpush.msra.mxu0 0.0
        %1452 = vmatpush.msra.mxu0 0.0
        %1453 = vmatpush.msra.mxu0 0.0
        %1454 = vmatpush.msra.mxu0 0.0
        %1455 = vmatpush.msra.mxu0 0.0
        %1456 = vmatpush.msra.mxu0 0.0
        %1457 = vmatpush.msra.mxu0 0.0
        %1458 = vmatpush.msra.mxu0 0.0
        %1459 = vmatpush.msra.mxu0 0.0
        %1460 = vmatpush.msra.mxu0 0.0
        %1461 = vmatpush.msra.mxu0 0.0
        %v1462 = vand.u32 %v1306, 4294901760
        %v1463 = vsub.f32 %v1306, %v1462
        %1464 = vmatpush.msra.mxu0 %v1463
        %v1465 = vand.u32 %v1305, 4294901760
        %v1466 = vsub.f32 %v1305, %v1465
        %1467 = vmatpush.msra.mxu0 %v1466
        %v1468 = vand.u32 %v1304, 4294901760
        %v1469 = vsub.f32 %v1304, %v1468
        %1470 = vmatpush.msra.mxu0 %v1469
        %v1471 = vand.u32 %v1303, 4294901760
        %v1472 = vsub.f32 %v1303, %v1471
        %1473 = vmatpush.msra.mxu0 %v1472
        %v1474 = vand.u32 %v1333, 4294901760
        %v1475 = vsub.f32 %v1333, %v1474
        %1476 = vmatmul.f32.gmra.mxu0 %v1475
        %v1477 = vpop.f32.mrf.mxu0
        %v1478 = vadd.f32 %v1436, %v1477
        %v1479 = vand.u32 %v1336, 4294901760
        %v1480 = vsub.f32 %v1336, %v1479
        %1481 = vmatmul.f32.gmra.mxu0 %v1480
        %v1482 = vpop.f32.mrf.mxu0
        %v1483 = vadd.f32 %v1440, %v1482
        %v1484 = vand.u32 %v1339, 4294901760
        %v1485 = vsub.f32 %v1339, %v1484
        %1486 = vmatmul.f32.gmra.mxu0 %v1485
        %v1487 = vpop.f32.mrf.mxu0
        %v1488 = vadd.f32 %v1444, %v1487
        %v1489 = vand.u32 %v1342, 4294901760
        %v1490 = vsub.f32 %v1342, %v1489
        %1491 = vmatmul.f32.gmra.mxu0 %v1490
        %v1492 = vpop.f32.mrf.mxu0
        %v1493 = vadd.f32 %v1448, %v1492
        %1494 = vdwg.mxu0
        %1495 = vmatpush.msra.mxu0 0.0
        %1496 = vmatpush.msra.mxu0 0.0
        %1497 = vmatpush.msra.mxu0 0.0
        %1498 = vmatpush.msra.mxu0 0.0
        %1499 = vmatpush.msra.mxu0 0.0
        %1500 = vmatpush.msra.mxu0 0.0
        %1501 = vmatpush.msra.mxu0 0.0
        %1502 = vmatpush.msra.mxu0 0.0
        %1503 = vmatpush.msra.mxu0 0.0
        %1504 = vmatpush.msra.mxu0 0.0
        %1505 = vmatpush.msra.mxu0 0.0
        %1506 = vmatpush.msra.mxu0 0.0
        %v1507 = vand.u32 %v1306, 4294901760
        %1508 = vmatpush.msra.mxu0 %v1507
        %v1509 = vand.u32 %v1305, 4294901760
        %1510 = vmatpush.msra.mxu0 %v1509
        %v1511 = vand.u32 %v1304, 4294901760
        %1512 = vmatpush.msra.mxu0 %v1511
        %v1513 = vand.u32 %v1303, 4294901760
        %1514 = vmatpush.msra.mxu0 %v1513
        %v1515 = vand.u32 %v1333, 4294901760
        %v1516 = vsub.f32 %v1333, %v1515
        %v1517 = vand.u32 %v1516, 4294901760
        %1518 = vmatmul.f32.gmra.mxu0 %v1517
        %v1519 = vpop.f32.mrf.mxu0
        %v1520 = vadd.f32 %v1478, %v1519
        %v1521 = vand.u32 %v1336, 4294901760
        %v1522 = vsub.f32 %v1336, %v1521
        %v1523 = vand.u32 %v1522, 4294901760
        %1524 = vmatmul.f32.gmra.mxu0 %v1523
        %v1525 = vpop.f32.mrf.mxu0
        %v1526 = vadd.f32 %v1483, %v1525
        %v1527 = vand.u32 %v1339, 4294901760
        %v1528 = vsub.f32 %v1339, %v1527
        %v1529 = vand.u32 %v1528, 4294901760
        %1530 = vmatmul.f32.gmra.mxu0 %v1529
        %v1531 = vpop.f32.mrf.mxu0
        %v1532 = vadd.f32 %v1488, %v1531
        %v1533 = vand.u32 %v1342, 4294901760
        %v1534 = vsub.f32 %v1342, %v1533
        %v1535 = vand.u32 %v1534, 4294901760
        %1536 = vmatmul.f32.gmra.mxu0 %v1535
        %v1537 = vpop.f32.mrf.mxu0
        %v1538 = vadd.f32 %v1493, %v1537
        %1539 = vdwg.mxu0
        %1540 = vmatpush.msra.mxu0 0.0
        %1541 = vmatpush.msra.mxu0 0.0
        %1542 = vmatpush.msra.mxu0 0.0
        %1543 = vmatpush.msra.mxu0 0.0
        %1544 = vmatpush.msra.mxu0 0.0
        %1545 = vmatpush.msra.mxu0 0.0
        %1546 = vmatpush.msra.mxu0 0.0
        %1547 = vmatpush.msra.mxu0 0.0
        %1548 = vmatpush.msra.mxu0 0.0
        %1549 = vmatpush.msra.mxu0 0.0
        %1550 = vmatpush.msra.mxu0 0.0
        %1551 = vmatpush.msra.mxu0 0.0
        %v1552 = vand.u32 %v1306, 4294901760
        %v1553 = vsub.f32 %v1306, %v1552
        %v1554 = vand.u32 %v1553, 4294901760
        %1555 = vmatpush.msra.mxu0 %v1554
        %v1556 = vand.u32 %v1305, 4294901760
        %v1557 = vsub.f32 %v1305, %v1556
        %v1558 = vand.u32 %v1557, 4294901760
        %1559 = vmatpush.msra.mxu0 %v1558
        %v1560 = vand.u32 %v1304, 4294901760
        %v1561 = vsub.f32 %v1304, %v1560
        %v1562 = vand.u32 %v1561, 4294901760
        %1563 = vmatpush.msra.mxu0 %v1562
        %v1564 = vand.u32 %v1303, 4294901760
        %v1565 = vsub.f32 %v1303, %v1564
        %v1566 = vand.u32 %v1565, 4294901760
        %1567 = vmatpush.msra.mxu0 %v1566
        %v1568 = vand.u32 %v1333, 4294901760
        %1569 = vmatmul.f32.gmra.mxu0 %v1568
        %v1570 = vpop.f32.mrf.mxu0
        %v1571 = vadd.f32 %v1520, %v1570
        %v1572 = vand.u32 %v1336, 4294901760
        %1573 = vmatmul.f32.gmra.mxu0 %v1572
        %v1574 = vpop.f32.mrf.mxu0
        %v1575 = vadd.f32 %v1526, %v1574
        %v1576 = vand.u32 %v1339, 4294901760
        %1577 = vmatmul.f32.gmra.mxu0 %v1576
        %v1578 = vpop.f32.mrf.mxu0
        %v1579 = vadd.f32 %v1532, %v1578
        %v1580 = vand.u32 %v1342, 4294901760
        %1581 = vmatmul.f32.gmra.mxu0 %v1580
        %v1582 = vpop.f32.mrf.mxu0
        %v1583 = vadd.f32 %v1538, %v1582
        %1584 = vdwg.mxu0
        %1585 = vmatpush.msra.mxu0 0.0
        %1586 = vmatpush.msra.mxu0 0.0
        %1587 = vmatpush.msra.mxu0 0.0
        %1588 = vmatpush.msra.mxu0 0.0
        %1589 = vmatpush.msra.mxu0 0.0
        %1590 = vmatpush.msra.mxu0 0.0
        %1591 = vmatpush.msra.mxu0 0.0
        %1592 = vmatpush.msra.mxu0 0.0
        %1593 = vmatpush.msra.mxu0 0.0
        %1594 = vmatpush.msra.mxu0 0.0
        %1595 = vmatpush.msra.mxu0 0.0
        %1596 = vmatpush.msra.mxu0 0.0
        %v1597 = vand.u32 %v1306, 4294901760
        %1598 = vmatpush.msra.mxu0 %v1597
        %v1599 = vand.u32 %v1305, 4294901760
        %1600 = vmatpush.msra.mxu0 %v1599
        %v1601 = vand.u32 %v1304, 4294901760
        %1602 = vmatpush.msra.mxu0 %v1601
        %v1603 = vand.u32 %v1303, 4294901760
        %1604 = vmatpush.msra.mxu0 %v1603
        %v1605 = vand.u32 %v1333, 4294901760
        %1606 = vmatmul.f32.gmra.mxu0 %v1605
        %v1607 = vpop.f32.mrf.mxu0
        %v1608 = vadd.f32 %v1571, %v1607
        %v1609 = vand.u32 %v1336, 4294901760
        %1610 = vmatmul.f32.gmra.mxu0 %v1609
        %v1611 = vpop.f32.mrf.mxu0
        %v1612 = vadd.f32 %v1575, %v1611
        %v1613 = vand.u32 %v1339, 4294901760
        %1614 = vmatmul.f32.gmra.mxu0 %v1613
        %v1615 = vpop.f32.mrf.mxu0
        %v1616 = vadd.f32 %v1579, %v1615
        %v1617 = vand.u32 %v1342, 4294901760
        %1618 = vmatmul.f32.gmra.mxu0 %v1617
        %v1619 = vpop.f32.mrf.mxu0
        %v1620 = vadd.f32 %v1583, %v1619
        %1621 = vdwg.mxu0
        %1622 = vmatpush.msra.mxu0 0.0
        %1623 = vmatpush.msra.mxu0 0.0
        %1624 = vmatpush.msra.mxu0 0.0
        %1625 = vmatpush.msra.mxu0 0.0
        %1626 = vmatpush.msra.mxu0 0.0
        %1627 = vmatpush.msra.mxu0 0.0
        %1628 = vmatpush.msra.mxu0 0.0
        %1629 = vmatpush.msra.mxu0 0.0
        %1630 = vmatpush.msra.mxu0 0.0
        %1631 = vmatpush.msra.mxu0 0.0
        %1632 = vmatpush.msra.mxu0 0.0
        %1633 = vmatpush.msra.mxu0 0.0
        %v1634 = vand.u32 %v1326, 4294901760
        %1635 = vmatpush.msra.mxu0 %v1634
        %v1636 = vand.u32 %v1325, 4294901760
        %1637 = vmatpush.msra.mxu0 %v1636
        %v1638 = vand.u32 %v1324, 4294901760
        %1639 = vmatpush.msra.mxu0 %v1638
        %v1640 = vand.u32 %v1323, 4294901760
        %1641 = vmatpush.msra.mxu0 %v1640
        %v1642 = vand.u32 %v1333, 4294901760
        %v1643 = vsub.f32 %v1333, %v1642
        %v1644 = vand.u32 %v1643, 4294901760
        %v1645 = vsub.f32 %v1643, %v1644
        %v1646 = vand.u32 %v1645, 4294901760
        %1647 = vmatmul.f32.gmra.mxu0 %v1646
        %v1648 = vpop.f32.mrf.mxu0
        %v1649 = vadd.f32 0.0, %v1648
        %v1650 = vand.u32 %v1336, 4294901760
        %v1651 = vsub.f32 %v1336, %v1650
        %v1652 = vand.u32 %v1651, 4294901760
        %v1653 = vsub.f32 %v1651, %v1652
        %v1654 = vand.u32 %v1653, 4294901760
        %1655 = vmatmul.f32.gmra.mxu0 %v1654
        %v1656 = vpop.f32.mrf.mxu0
        %v1657 = vadd.f32 0.0, %v1656
        %v1658 = vand.u32 %v1339, 4294901760
        %v1659 = vsub.f32 %v1339, %v1658
        %v1660 = vand.u32 %v1659, 4294901760
        %v1661 = vsub.f32 %v1659, %v1660
        %v1662 = vand.u32 %v1661, 4294901760
        %1663 = vmatmul.f32.gmra.mxu0 %v1662
        %v1664 = vpop.f32.mrf.mxu0
        %v1665 = vadd.f32 0.0, %v1664
        %v1666 = vand.u32 %v1342, 4294901760
        %v1667 = vsub.f32 %v1342, %v1666
        %v1668 = vand.u32 %v1667, 4294901760
        %v1669 = vsub.f32 %v1667, %v1668
        %v1670 = vand.u32 %v1669, 4294901760
        %1671 = vmatmul.f32.gmra.mxu0 %v1670
        %v1672 = vpop.f32.mrf.mxu0
        %v1673 = vadd.f32 0.0, %v1672
        %1674 = vdwg.mxu0
        %1675 = vmatpush.msra.mxu0 0.0
        %1676 = vmatpush.msra.mxu0 0.0
        %1677 = vmatpush.msra.mxu0 0.0
        %1678 = vmatpush.msra.mxu0 0.0
        %1679 = vmatpush.msra.mxu0 0.0
        %1680 = vmatpush.msra.mxu0 0.0
        %1681 = vmatpush.msra.mxu0 0.0
        %1682 = vmatpush.msra.mxu0 0.0
        %1683 = vmatpush.msra.mxu0 0.0
        %1684 = vmatpush.msra.mxu0 0.0
        %1685 = vmatpush.msra.mxu0 0.0
        %1686 = vmatpush.msra.mxu0 0.0
        %v1687 = vand.u32 %v1326, 4294901760
        %v1688 = vsub.f32 %v1326, %v1687
        %v1689 = vand.u32 %v1688, 4294901760
        %v1690 = vsub.f32 %v1688, %v1689
        %v1691 = vand.u32 %v1690, 4294901760
        %1692 = vmatpush.msra.mxu0 %v1691
        %v1693 = vand.u32 %v1325, 4294901760
        %v1694 = vsub.f32 %v1325, %v1693
        %v1695 = vand.u32 %v1694, 4294901760
        %v1696 = vsub.f32 %v1694, %v1695
        %v1697 = vand.u32 %v1696, 4294901760
        %1698 = vmatpush.msra.mxu0 %v1697
        %v1699 = vand.u32 %v1324, 4294901760
        %v1700 = vsub.f32 %v1324, %v1699
        %v1701 = vand.u32 %v1700, 4294901760
        %v1702 = vsub.f32 %v1700, %v1701
        %v1703 = vand.u32 %v1702, 4294901760
        %1704 = vmatpush.msra.mxu0 %v1703
        %v1705 = vand.u32 %v1323, 4294901760
        %v1706 = vsub.f32 %v1323, %v1705
        %v1707 = vand.u32 %v1706, 4294901760
        %v1708 = vsub.f32 %v1706, %v1707
        %v1709 = vand.u32 %v1708, 4294901760
        %1710 = vmatpush.msra.mxu0 %v1709
        %v1711 = vand.u32 %v1333, 4294901760
        %1712 = vmatmul.f32.gmra.mxu0 %v1711
        %v1713 = vpop.f32.mrf.mxu0
        %v1714 = vadd.f32 %v1649, %v1713
        %v1715 = vand.u32 %v1336, 4294901760
        %1716 = vmatmul.f32.gmra.mxu0 %v1715
        %v1717 = vpop.f32.mrf.mxu0
        %v1718 = vadd.f32 %v1657, %v1717
        %v1719 = vand.u32 %v1339, 4294901760
        %1720 = vmatmul.f32.gmra.mxu0 %v1719
        %v1721 = vpop.f32.mrf.mxu0
        %v1722 = vadd.f32 %v1665, %v1721
        %v1723 = vand.u32 %v1342, 4294901760
        %1724 = vmatmul.f32.gmra.mxu0 %v1723
        %v1725 = vpop.f32.mrf.mxu0
        %v1726 = vadd.f32 %v1673, %v1725
        %1727 = vdwg.mxu0
        %1728 = vmatpush.msra.mxu0 0.0
        %1729 = vmatpush.msra.mxu0 0.0
        %1730 = vmatpush.msra.mxu0 0.0
        %1731 = vmatpush.msra.mxu0 0.0
        %1732 = vmatpush.msra.mxu0 0.0
        %1733 = vmatpush.msra.mxu0 0.0
        %1734 = vmatpush.msra.mxu0 0.0
        %1735 = vmatpush.msra.mxu0 0.0
        %1736 = vmatpush.msra.mxu0 0.0
        %1737 = vmatpush.msra.mxu0 0.0
        %1738 = vmatpush.msra.mxu0 0.0
        %1739 = vmatpush.msra.mxu0 0.0
        %v1740 = vand.u32 %v1326, 4294901760
        %v1741 = vsub.f32 %v1326, %v1740
        %1742 = vmatpush.msra.mxu0 %v1741
        %v1743 = vand.u32 %v1325, 4294901760
        %v1744 = vsub.f32 %v1325, %v1743
        %1745 = vmatpush.msra.mxu0 %v1744
        %v1746 = vand.u32 %v1324, 4294901760
        %v1747 = vsub.f32 %v1324, %v1746
        %1748 = vmatpush.msra.mxu0 %v1747
        %v1749 = vand.u32 %v1323, 4294901760
        %v1750 = vsub.f32 %v1323, %v1749
        %1751 = vmatpush.msra.mxu0 %v1750
        %v1752 = vand.u32 %v1333, 4294901760
        %v1753 = vsub.f32 %v1333, %v1752
        %1754 = vmatmul.f32.gmra.mxu0 %v1753
        %v1755 = vpop.f32.mrf.mxu0
        %v1756 = vadd.f32 %v1714, %v1755
        %v1757 = vand.u32 %v1336, 4294901760
        %v1758 = vsub.f32 %v1336, %v1757
        %1759 = vmatmul.f32.gmra.mxu0 %v1758
        %v1760 = vpop.f32.mrf.mxu0
        %v1761 = vadd.f32 %v1718, %v1760
        %v1762 = vand.u32 %v1339, 4294901760
        %v1763 = vsub.f32 %v1339, %v1762
        %1764 = vmatmul.f32.gmra.mxu0 %v1763
        %v1765 = vpop.f32.mrf.mxu0
        %v1766 = vadd.f32 %v1722, %v1765
        %v1767 = vand.u32 %v1342, 4294901760
        %v1768 = vsub.f32 %v1342, %v1767
        %1769 = vmatmul.f32.gmra.mxu0 %v1768
        %v1770 = vpop.f32.mrf.mxu0
        %v1771 = vadd.f32 %v1726, %v1770
        %1772 = vdwg.mxu0
        %1773 = vmatpush.msra.mxu0 0.0
        %1774 = vmatpush.msra.mxu0 0.0
        %1775 = vmatpush.msra.mxu0 0.0
        %1776 = vmatpush.msra.mxu0 0.0
        %1777 = vmatpush.msra.mxu0 0.0
        %1778 = vmatpush.msra.mxu0 0.0
        %1779 = vmatpush.msra.mxu0 0.0
        %1780 = vmatpush.msra.mxu0 0.0
        %1781 = vmatpush.msra.mxu0 0.0
        %1782 = vmatpush.msra.mxu0 0.0
        %1783 = vmatpush.msra.mxu0 0.0
        %1784 = vmatpush.msra.mxu0 0.0
        %v1785 = vand.u32 %v1326, 4294901760
        %1786 = vmatpush.msra.mxu0 %v1785
        %v1787 = vand.u32 %v1325, 4294901760
        %1788 = vmatpush.msra.mxu0 %v1787
        %v1789 = vand.u32 %v1324, 4294901760
        %1790 = vmatpush.msra.mxu0 %v1789
        %v1791 = vand.u32 %v1323, 4294901760
        %1792 = vmatpush.msra.mxu0 %v1791
        %v1793 = vand.u32 %v1333, 4294901760
        %v1794 = vsub.f32 %v1333, %v1793
        %v1795 = vand.u32 %v1794, 4294901760
        %1796 = vmatmul.f32.gmra.mxu0 %v1795
        %v1797 = vpop.f32.mrf.mxu0
        %v1798 = vadd.f32 %v1756, %v1797
        %v1799 = vand.u32 %v1336, 4294901760
        %v1800 = vsub.f32 %v1336, %v1799
        %v1801 = vand.u32 %v1800, 4294901760
        %1802 = vmatmul.f32.gmra.mxu0 %v1801
        %v1803 = vpop.f32.mrf.mxu0
        %v1804 = vadd.f32 %v1761, %v1803
        %v1805 = vand.u32 %v1339, 4294901760
        %v1806 = vsub.f32 %v1339, %v1805
        %v1807 = vand.u32 %v1806, 4294901760
        %1808 = vmatmul.f32.gmra.mxu0 %v1807
        %v1809 = vpop.f32.mrf.mxu0
        %v1810 = vadd.f32 %v1766, %v1809
        %v1811 = vand.u32 %v1342, 4294901760
        %v1812 = vsub.f32 %v1342, %v1811
        %v1813 = vand.u32 %v1812, 4294901760
        %1814 = vmatmul.f32.gmra.mxu0 %v1813
        %v1815 = vpop.f32.mrf.mxu0
        %v1816 = vadd.f32 %v1771, %v1815
        %1817 = vdwg.mxu0
        %1818 = vmatpush.msra.mxu0 0.0
        %1819 = vmatpush.msra.mxu0 0.0
        %1820 = vmatpush.msra.mxu0 0.0
        %1821 = vmatpush.msra.mxu0 0.0
        %1822 = vmatpush.msra.mxu0 0.0
        %1823 = vmatpush.msra.mxu0 0.0
        %1824 = vmatpush.msra.mxu0 0.0
        %1825 = vmatpush.msra.mxu0 0.0
        %1826 = vmatpush.msra.mxu0 0.0
        %1827 = vmatpush.msra.mxu0 0.0
        %1828 = vmatpush.msra.mxu0 0.0
        %1829 = vmatpush.msra.mxu0 0.0
        %v1830 = vand.u32 %v1326, 4294901760
        %v1831 = vsub.f32 %v1326, %v1830
        %v1832 = vand.u32 %v1831, 4294901760
        %1833 = vmatpush.msra.mxu0 %v1832
        %v1834 = vand.u32 %v1325, 4294901760
        %v1835 = vsub.f32 %v1325, %v1834
        %v1836 = vand.u32 %v1835, 4294901760
        %1837 = vmatpush.msra.mxu0 %v1836
        %v1838 = vand.u32 %v1324, 4294901760
        %v1839 = vsub.f32 %v1324, %v1838
        %v1840 = vand.u32 %v1839, 4294901760
        %1841 = vmatpush.msra.mxu0 %v1840
        %v1842 = vand.u32 %v1323, 4294901760
        %v1843 = vsub.f32 %v1323, %v1842
        %v1844 = vand.u32 %v1843, 4294901760
        %1845 = vmatpush.msra.mxu0 %v1844
        %v1846 = vand.u32 %v1333, 4294901760
        %1847 = vmatmul.f32.gmra.mxu0 %v1846
        %v1848 = vpop.f32.mrf.mxu0
        %v1849 = vadd.f32 %v1798, %v1848
        %v1850 = vand.u32 %v1336, 4294901760
        %1851 = vmatmul.f32.gmra.mxu0 %v1850
        %v1852 = vpop.f32.mrf.mxu0
        %v1853 = vadd.f32 %v1804, %v1852
        %v1854 = vand.u32 %v1339, 4294901760
        %1855 = vmatmul.f32.gmra.mxu0 %v1854
        %v1856 = vpop.f32.mrf.mxu0
        %v1857 = vadd.f32 %v1810, %v1856
        %v1858 = vand.u32 %v1342, 4294901760
        %1859 = vmatmul.f32.gmra.mxu0 %v1858
        %v1860 = vpop.f32.mrf.mxu0
        %v1861 = vadd.f32 %v1816, %v1860
        %1862 = vdwg.mxu0
        %1863 = vmatpush.msra.mxu0 0.0
        %1864 = vmatpush.msra.mxu0 0.0
        %1865 = vmatpush.msra.mxu0 0.0
        %1866 = vmatpush.msra.mxu0 0.0
        %1867 = vmatpush.msra.mxu0 0.0
        %1868 = vmatpush.msra.mxu0 0.0
        %1869 = vmatpush.msra.mxu0 0.0
        %1870 = vmatpush.msra.mxu0 0.0
        %1871 = vmatpush.msra.mxu0 0.0
        %1872 = vmatpush.msra.mxu0 0.0
        %1873 = vmatpush.msra.mxu0 0.0
        %1874 = vmatpush.msra.mxu0 0.0
        %v1875 = vand.u32 %v1326, 4294901760
        %1876 = vmatpush.msra.mxu0 %v1875
        %v1877 = vand.u32 %v1325, 4294901760
        %1878 = vmatpush.msra.mxu0 %v1877
        %v1879 = vand.u32 %v1324, 4294901760
        %1880 = vmatpush.msra.mxu0 %v1879
        %v1881 = vand.u32 %v1323, 4294901760
        %1882 = vmatpush.msra.mxu0 %v1881
        %v1883 = vand.u32 %v1333, 4294901760
        %1884 = vmatmul.f32.gmra.mxu0 %v1883
        %v1885 = vpop.f32.mrf.mxu0
        %v1886 = vadd.f32 %v1849, %v1885
        %v1887 = vand.u32 %v1336, 4294901760
        %1888 = vmatmul.f32.gmra.mxu0 %v1887
        %v1889 = vpop.f32.mrf.mxu0
        %v1890 = vadd.f32 %v1853, %v1889
        %v1891 = vand.u32 %v1339, 4294901760
        %1892 = vmatmul.f32.gmra.mxu0 %v1891
        %v1893 = vpop.f32.mrf.mxu0
        %v1894 = vadd.f32 %v1857, %v1893
        %v1895 = vand.u32 %v1342, 4294901760
        %1896 = vmatmul.f32.gmra.mxu0 %v1895
        %v1897 = vpop.f32.mrf.mxu0
        %v1898 = vadd.f32 %v1861, %v1897
        %1899 = vdwg.mxu0
        %v1900 = vmul.f32 %v1608, %v1608
        %v1901 = vmul.f32 %v1612, %v1612
        %v1902 = vmul.f32 %v1616, %v1616
        %v1903 = vmul.f32 %v1620, %v1620
        %v1904 = vsub.f32 %v1886, %v1900
        %v1905 = vsub.f32 %v1890, %v1901
        %v1906 = vsub.f32 %v1894, %v1902
        %v1907 = vsub.f32 %v1898, %v1903
        %v1908 = vadd.f32 %v1904, 1e-05
        %v1909 = vadd.f32 %v1905, 1e-05
        %v1910 = vadd.f32 %v1906, 1e-05
        %v1911 = vadd.f32 %v1907, 1e-05
        %v1912 = vrsqrt.pop %v1908
        %v1913 = vmul.f32 %v1912, %v1908
        %v1914 = vmul.f32 %v1913, %v1912
        %v1915 = vmul.f32 0.5, %v1914
        %v1916 = vsub.f32 1.5, %v1915
        %v1917 = vmul.f32 %v1912, %v1916
        %vm1918 = vweird.f32 %v1908
        %vm1919 = vweird.f32 %v1912
        %vm1920 = vmor %vm1918, %vm1919
        %v1921 = vsel %vm1920, %v1912, %v1917
        %v1922 = vrsqrt.pop %v1909
        %v1923 = vmul.f32 %v1922, %v1909
        %v1924 = vmul.f32 %v1923, %v1922
        %v1925 = vmul.f32 0.5, %v1924
        %v1926 = vsub.f32 1.5, %v1925
        %v1927 = vmul.f32 %v1922, %v1926
        %vm1928 = vweird.f32 %v1909
        %vm1929 = vweird.f32 %v1922
        %vm1930 = vmor %vm1928, %vm1929
        %v1931 = vsel %vm1930, %v1922, %v1927
        %v1932 = vrsqrt.pop %v1910
        %v1933 = vmul.f32 %v1932, %v1910
        %v1934 = vmul.f32 %v1933, %v1932
        %v1935 = vmul.f32 0.5, %v1934
        %v1936 = vsub.f32 1.5, %v1935
        %v1937 = vmul.f32 %v1932, %v1936
        %vm1938 = vweird.f32 %v1910
        %vm1939 = vweird.f32 %v1932
        %vm1940 = vmor %vm1938, %vm1939
        %v1941 = vsel %vm1940, %v1932, %v1937
        %v1942 = vrsqrt.pop %v1911
        %v1943 = vmul.f32 %v1942, %v1911
        %v1944 = vmul.f32 %v1943, %v1942
        %v1945 = vmul.f32 0.5, %v1944
        %v1946 = vsub.f32 1.5, %v1945
        %v1947 = vmul.f32 %v1942, %v1946
        %vm1948 = vweird.f32 %v1911
        %vm1949 = vweird.f32 %v1942
        %vm1950 = vmor %vm1948, %vm1949
        %v1951 = vsel %vm1950, %v1942, %v1947
        %v1952 = vld [vmem:[%s477] sm:$0xff]
        %v1953 = vld [vmem:[%s477 + $0x8] sm:$0xff]
        %v1954 = vld [vmem:[%s477 + $0x10] sm:$0xff]
        %v1955 = vld [vmem:[%s477 + $0x18] sm:$0xff]
        %v1956 = vmul.f32 %v1921, %v1952
        %v1957 = vmul.f32 %v1931, %v1953
        %v1958 = vmul.f32 %v1941, %v1954
        %v1959 = vmul.f32 %v1951, %v1955
        %v1960 = vsub.f32 %v1295, %v1608
        %v1961 = vsub.f32 %v1296, %v1612
        %v1962 = vsub.f32 %v1297, %v1616
        %v1963 = vsub.f32 %v1298, %v1620
        %v1964 = vmul.f32 %v1960, %v1956
        %v1965 = vmul.f32 %v1961, %v1957
        %v1966 = vmul.f32 %v1962, %v1958
        %v1967 = vmul.f32 %v1963, %v1959
        %v1968 = vld [vmem:[%s483] sm:$0xff]
        %v1969 = vld [vmem:[%s483 + $0x8] sm:$0xff]
        %v1970 = vld [vmem:[%s483 + $0x10] sm:$0xff]
        %v1971 = vld [vmem:[%s483 + $0x18] sm:$0xff]
        %v1972 = vadd.f32 %v1964, %v1968
        %v1973 = vadd.f32 %v1965, %v1969
        %v1974 = vadd.f32 %v1966, %v1970
        %v1975 = vadd.f32 %v1967, %v1971
        %v1976 = vld [vmem:[%s493] sm:$0xff]
        %v1977 = vld [vmem:[%s493 + $0x8] sm:$0xff]
        %v1978 = vld [vmem:[%s493 + $0x10] sm:$0xff]
        %v1979 = vld [vmem:[%s493 + $0x18] sm:$0xff]
        %v1980 = vadd.f32 %v1976, 1.0
        %v1981 = vadd.f32 %v1977, 1.0
        %v1982 = vadd.f32 %v1978, 1.0
        %v1983 = vadd.f32 %v1979, 1.0
        %v1984 = vmul.f32 %v1956, %v1980
        %v1985 = vmul.f32 %v1957, %v1981
        %v1986 = vmul.f32 %v1958, %v1982
        %v1987 = vmul.f32 %v1959, %v1983
        %v1988 = vmul.f32 %v1972, %v1980
        %v1989 = vmul.f32 %v1973, %v1981
        %v1990 = vmul.f32 %v1974, %v1982
        %v1991 = vmul.f32 %v1975, %v1983
        %v1992 = vld [vmem:[%s503] sm:$0xff]
        %v1993 = vld [vmem:[%s503 + $0x8] sm:$0xff]
        %v1994 = vld [vmem:[%s503 + $0x10] sm:$0xff]
        %v1995 = vld [vmem:[%s503 + $0x18] sm:$0xff]
        %v1996 = vadd.f32 %v1988, %v1992
        %v1997 = vadd.f32 %v1989, %v1993
        %v1998 = vadd.f32 %v1990, %v1994
        %v1999 = vadd.f32 %v1991, %v1995
        %2001 = vset.pattern.permute.xlu0 0
        %2002 = vperm.xlu0 %2001, %v1984
        %v2003 = vpop.permute.xlu0 %2002
        %2006 = vset.pattern.permute.xlu0 0
        %2007 = vperm.xlu0 %2006, %v1985
        %v2008 = vpop.permute.xlu0 %2007
        %2011 = vset.pattern.permute.xlu0 0
        %2012 = vperm.xlu0 %2011, %v1986
        %v2013 = vpop.permute.xlu0 %2012
        %2016 = vset.pattern.permute.xlu0 0
        %2017 = vperm.xlu0 %2016, %v1987
        %v2018 = vpop.permute.xlu0 %2017
        %v2020 = vmul.f32 %v1255, %v2003
        %v2021 = vmul.f32 %v1256, %v2003
        %v2022 = vmul.f32 %v1257, %v2008
        %v2023 = vmul.f32 %v1258, %v2008
        %v2024 = vmul.f32 %v1259, %v2013
        %v2025 = vmul.f32 %v1260, %v2013
        %v2026 = vmul.f32 %v1261, %v2018
        %v2027 = vmul.f32 %v1262, %v2018
        %2029 = vset.pattern.permute.xlu0 0
        %2030 = vperm.xlu0 %2029, %v1996
        %v2031 = vpop.permute.xlu0 %2030
        %2034 = vset.pattern.permute.xlu0 0
        %2035 = vperm.xlu0 %2034, %v1997
        %v2036 = vpop.permute.xlu0 %2035
        %2039 = vset.pattern.permute.xlu0 0
        %2040 = vperm.xlu0 %2039, %v1998
        %v2041 = vpop.permute.xlu0 %2040
        %2044 = vset.pattern.permute.xlu0 0
        %2045 = vperm.xlu0 %2044, %v1999
        %v2046 = vpop.permute.xlu0 %2045
        %v2048 = vadd.f32 %v2020, %v2031
        %v2049 = vadd.f32 %v2021, %v2031
        %v2050 = vadd.f32 %v2022, %v2036
        %v2051 = vadd.f32 %v2023, %v2036
        %v2052 = vadd.f32 %v2024, %v2041
        %v2053 = vadd.f32 %v2025, %v2041
        %v2054 = vadd.f32 %v2026, %v2046
        %v2055 = vadd.f32 %v2027, %v2046
        %v2056 = vsub.f32 0.0, %v2048
        %v2057 = vsub.f32 0.0, %v2049
        %v2058 = vsub.f32 0.0, %v2050
        %v2059 = vsub.f32 0.0, %v2051
        %v2060 = vsub.f32 0.0, %v2052
        %v2061 = vsub.f32 0.0, %v2053
        %v2062 = vsub.f32 0.0, %v2054
        %v2063 = vsub.f32 0.0, %v2055
        %v2064 = vmul.f32 %v2056, 1.442695
        %v2065 = vpow.pop %v2064
        %v2066 = vmul.f32 %v2057, 1.442695
        %v2067 = vpow.pop %v2066
        %v2068 = vmul.f32 %v2058, 1.442695
        %v2069 = vpow.pop %v2068
        %v2070 = vmul.f32 %v2059, 1.442695
        %v2071 = vpow.pop %v2070
        %v2072 = vmul.f32 %v2060, 1.442695
        %v2073 = vpow.pop %v2072
        %v2074 = vmul.f32 %v2061, 1.442695
        %v2075 = vpow.pop %v2074
        %v2076 = vmul.f32 %v2062, 1.442695
        %v2077 = vpow.pop %v2076
        %v2078 = vmul.f32 %v2063, 1.442695
        %v2079 = vpow.pop %v2078
        %v2080 = vadd.f32 %v2065, 1.0
        %v2081 = vadd.f32 %v2067, 1.0
        %v2082 = vadd.f32 %v2069, 1.0
        %v2083 = vadd.f32 %v2071, 1.0
        %v2084 = vadd.f32 %v2073, 1.0
        %v2085 = vadd.f32 %v2075, 1.0
        %v2086 = vadd.f32 %v2077, 1.0
        %v2087 = vadd.f32 %v2079, 1.0
        %v2088 = vrcp.pop %v2080
        %v2089 = vrcp.pop %v2081
        %v2090 = vrcp.pop %v2082
        %v2091 = vrcp.pop %v2083
        %v2092 = vrcp.pop %v2084
        %v2093 = vrcp.pop %v2085
        %v2094 = vrcp.pop %v2086
        %v2095 = vrcp.pop %v2087
        %v2096 = vmul.f32 %v2048, %v2088
        %v2097 = vmul.f32 %v2049, %v2089
        %v2098 = vmul.f32 %v2050, %v2090
        %v2099 = vmul.f32 %v2051, %v2091
        %v2100 = vmul.f32 %v2052, %v2092
        %v2101 = vmul.f32 %v2053, %v2093
        %v2102 = vmul.f32 %v2054, %v2094
        %v2103 = vmul.f32 %v2055, %v2095
        %2104 = vst [vmem:[%s455] sm:$0xff] %v2096
        %2105 = vst [vmem:[%s455 + $0x8] sm:$0xff] %v2097
        %2106 = vst [vmem:[%s455 + $0x10] sm:$0xff] %v2098
        %2107 = vst [vmem:[%s455 + $0x18] sm:$0xff] %v2099
        %2108 = vst [vmem:[%s455 + $0x20] sm:$0xff] %v2100
        %2109 = vst [vmem:[%s455 + $0x28] sm:$0xff] %v2101
        %2110 = vst [vmem:[%s455 + $0x30] sm:$0xff] %v2102
        %2111 = vst [vmem:[%s455 + $0x38] sm:$0xff] %v2103
        %s2112 = sand.u32 %s273, 1
        %s2113 = scalar_lea.sflag [#allocation3], %s2112
        %s2114 = sand.u32 %s273, 1
        %s2115 = smul.addr %s2114, 64
        %s2116 = scalar_lea.vmem [#allocation2], %s2115
        // Predicated region
        $region57: #{tpu_custom_call.1} parent=55 // pred_check
          %p2117 = pneg %p283
        $region58: #{tpu_custom_call.1} parent=55 // pred_check_branch
          %2119 = sbr.rel (%p2117) target = $region60
        $region59: #{tpu_custom_call.1} parent=55 // pred_region
          %s2120 = smul.u32 4, %s28
          %2122 = vsyncadd %s2113, 0
          %s2123 = smul.addr %s2120, 2
          %s2124 = smul.addr %s27, 8
          %s2125 = sadd.s32 %s2123, %s2124
          %s2126 = smul.addr %s2125, 8
          %s2127 = scalar_lea.hbm %s9, %s2126
          %s2128 = sshll.u32 %s2116, 4
          %s2129 = int_to_ptr.vmem [resolvable:$true] %s2128
          %s2130 = sshll.u32 %s2127, 4
          %s2131 = int_to_ptr.hbm [resolvable:$true] %s2130
          %2136 = dma.vmem_to_hbm [thread:$0]  %s2129, 1024, %s2131, %s2113, 256, 256, 16
        $region60: #{tpu_custom_call.1} parent=55 // pred_fallthru
          _
      $region56: #{tpu_custom_call.1} parent=5 // pred_fallthru
        _
      %p2137 = scmp.le.s32.totalorder 2, %s18
      // Predicated region
      $region61: #{tpu_custom_call.1} parent=5 // pred_check
        %p2138 = pneg %p2137
      $region62: #{tpu_custom_call.1} parent=5 // pred_check_branch
        %2140 = sbr.rel (%p2138) target = $region64
      $region63: #{tpu_custom_call.1} parent=5 // pred_region
        %s2141 = ssub.s32 %s18, 2
        // Predicated region
        $region65: #{tpu_custom_call.1} parent=63 // pred_check
          %p2142 = pneg %p289
        $region66: #{tpu_custom_call.1} parent=63 // pred_check_branch
          %2144 = sbr.rel (%p2142) target = $region68
        $region67: #{tpu_custom_call.1} parent=63 // pred_region
          %s2145 = sand.u32 %s274, 1
          %s2146 = scalar_lea.sflag [#allocation3], %s2145
          %s2147 = sand.u32 %s274, 1
          %s2148 = smul.addr %s2147, 64
          %s2149 = scalar_lea.vmem [#allocation2], %s2148
          %2151 = dma.done %s2146, 1024
        $region68: #{tpu_custom_call.1} parent=63 // pred_fallthru
          _
      $region64: #{tpu_custom_call.1} parent=5 // pred_fallthru
        _
    $region6: #{tpu_custom_call.1} parent=1 // loop_footer
      %s22 = sadd.s32 1, %s18
    $region7: #{tpu_custom_call.1} parent=1 // loop_footer_branch
      %17 = sbr.rel target = $region3
    $region8: #{tpu_custom_call.1} parent=1 // loop_exit
      _
    %2152 = vsyncpa [#allocation3], 1
    %s2153 = scalar_lea.sflag [#allocation3], 1
    %2154 = vsyncpa %s2153, 1

</llo_original>
